<compile_context>
chip_gen: v7x
topology: tpu7x:2x2x1
jax: 0.10.0
libtpu: 0.0.40
codegen_flags: <defaults>
</compile_context>

<pallas_src>
import functools

import jax
import jax.numpy as jnp
from jax.experimental import pallas as pl
from jax.experimental.pallas import tpu as pltpu


_NEG_INF = -1e30  # large finite negative: masked lanes underflow to exactly 0 after exp


# --------------------------------------------------------------------------- #
# Prologue: fused QKV projection (scale already folded into the Wq columns).
# --------------------------------------------------------------------------- #
def _qkv_proj_kernel(x_ref, w_ref, q_ref, k_ref, v_ref):
    # x_ref: (t, C), w_ref: (C, 3H) = [Wq^T * C**-0.5 | Wk^T | Wv^T]
    H = q_ref.shape[-1]
    qkv = jnp.dot(x_ref[...], w_ref[...], preferred_element_type=jnp.float32)
    # Value-level column slices happen once per prologue tile (not per kv step).
    q_ref[...] = qkv[:, :H].astype(q_ref.dtype)
    k_ref[...] = qkv[:, H:2 * H].astype(k_ref.dtype)
    v_ref[...] = qkv[:, 2 * H:].astype(v_ref.dtype)


# --------------------------------------------------------------------------- #
# Flash-style causal attention over pre-projected Q/K/V.
# grid = (B, T//tq, T//tk); kv axis last and "arbitrary".
# --------------------------------------------------------------------------- #
def _attn_kernel(q_ref, k_ref, v_ref, o_ref, acc_sc, m_sc, l_sc):
    qi = pl.program_id(1)
    ki = pl.program_id(2)
    nk = pl.num_programs(2)

    tq, H = q_ref.shape
    tk = k_ref.shape[0]

    @pl.when(ki == 0)
    def _init():
        m_sc[...] = jnp.full((tq, 1), _NEG_INF, jnp.float32)
        l_sc[...] = jnp.zeros((tq, 1), jnp.float32)
        acc_sc[...] = jnp.zeros((tq, H), jnp.float32)

    def _scores():
        # q @ k^T contracting last dims; operands stay in input dtype, f32 accumulate.
        return jax.lax.dot_general(
            q_ref[...], k_ref[...], (((1,), (1,)), ((), ())),
            preferred_element_type=jnp.float32)

    def _update(s):
        # Online softmax update (all statistics in f32).
        m_prev = m_sc[...]
        m_new = jnp.maximum(m_prev, jnp.max(s, axis=-1, keepdims=True))
        alpha = jnp.exp(m_prev - m_new)
        p = jnp.exp(s - m_new)
        l_sc[...] = alpha * l_sc[...] + jnp.sum(p, axis=-1, keepdims=True)
        acc_sc[...] = alpha * acc_sc[...] + jnp.dot(
            p.astype(v_ref.dtype), v_ref[...], preferred_element_type=jnp.float32)
        m_sc[...] = m_new

    # Tiles strictly below the diagonal need no masking (tq == tk).
    @pl.when(ki < qi)
    def _below():
        _update(_scores())

    # Diagonal tile: local causal mask (global offsets cancel since tq == tk).
    @pl.when(ki == qi)
    def _diag():
        row = jax.lax.broadcasted_iota(jnp.int32, (tq, tk), 0)
        col = jax.lax.broadcasted_iota(jnp.int32, (tq, tk), 1)
        _update(jnp.where(col <= row, _scores(), _NEG_INF))

    # (ki > qi: entirely above the diagonal -> no compute, and the clamped
    #  index_map means no DMA either.)

    @pl.when(ki == nk - 1)
    def _finalize():
        # Dropout: eval-mode identity.
        inv_l = pl.reciprocal(l_sc[...], approx=True)
        o_ref[...] = (acc_sc[...] * inv_l).astype(o_ref.dtype)


def _pick_tile(T: int, max_tile: int) -> int:
    """Largest tile <= max_tile that evenly divides T (falls back to full T).

    NOTE: for awkward large prime-ish T the fallback returns T itself, which can
    blow VMEM; callers with such shapes should pad T.
    """
    if T <= max_tile:
        return T
    for t in (max_tile, 512, 256, 128, 64, 32, 16, 8):
        if t <= max_tile and T % t == 0:
            return t
    return T


@functools.partial(jax.jit, static_argnames=("max_tile", "compute_dtype"))
def head_forward(x, wq, wk, wv, *, max_tile=256, compute_dtype=None):
    """Forward pass of the PyTorch `Head` module (eval mode).

    x: (B, T, C); wq/wk/wv: PyTorch-style (head_size, C) nn.Linear weights.
    max_tile: q/kv tile size (tq == tk). 256 is a good default; v5e prefers 128,
              v6e (128 MiB VMEM) can afford 512.
    compute_dtype: optional dtype for the matmul operands (e.g. jnp.bfloat16 to
              use bf16 MXU passes for f32 inputs); accumulation is always f32 and
              the output keeps x.dtype.
    """
    B, T, C = x.shape
    H = wq.shape[0]
    out_dtype = x.dtype
    cdt = compute_dtype if compute_dtype is not None else x.dtype

    scale = C ** (-0.5)  # NOTE: module scales by embedding dim C, not head_size.
    # Fuse + pre-transpose weights once, folding the softmax scale into Wq (free).
    w_qkv = jnp.concatenate([wq.T * scale, wk.T, wv.T], axis=1).astype(cdt)
    x_c = x.astype(cdt)

    t = _pick_tile(T, max_tile)
    tq = tk = t  # equal tiles are required by the DMA clamp + diagonal-only mask

    # ---- Prologue: Q/K/V projection, done exactly once per token. ---- #
    q, k, v = pl.pallas_call(
        _qkv_proj_kernel,
        out_shape=tuple(jax.ShapeDtypeStruct((B, T, H), cdt) for _ in range(3)),
        grid_spec=pltpu.PrefetchScalarGridSpec(
            num_scalar_prefetch=0,
            grid=(B, T // t),
            in_specs=[
                pl.BlockSpec((None, t, C), lambda b, i: (b, i, 0)),   # x tile
                pl.BlockSpec((C, 3 * H), lambda b, i: (0, 0)),        # fused Wqkv
            ],
            out_specs=[
                pl.BlockSpec((None, t, H), lambda b, i: (b, i, 0)),
                pl.BlockSpec((None, t, H), lambda b, i: (b, i, 0)),
                pl.BlockSpec((None, t, H), lambda b, i: (b, i, 0)),
            ],
        ),
        compiler_params=pltpu.CompilerParams(
            dimension_semantics=("parallel", "parallel")),
    )(x_c, w_qkv)

    # ---- Flash attention over the pre-projected tiles. ---- #
    grid = (B, T // tq, T // tk)

    # Clamp the kv block index so steps entirely above the causal diagonal revisit
    # the previous block (Pallas elides the DMA for unchanged block indices).
    kv_index_map = lambda b, qi, ki: (b, jnp.minimum(ki, qi), 0)

    return pl.pallas_call(
        _attn_kernel,
        out_shape=jax.ShapeDtypeStruct((B, T, H), out_dtype),
        grid_spec=pltpu.PrefetchScalarGridSpec(
            num_scalar_prefetch=0,
            grid=grid,
            in_specs=[
                pl.BlockSpec((None, tq, H), lambda b, qi, ki: (b, qi, 0)),  # Q
                pl.BlockSpec((None, tk, H), kv_index_map),                  # K
                pl.BlockSpec((None, tk, H), kv_index_map),                  # V
            ],
            out_specs=pl.BlockSpec((None, tq, H), lambda b, qi, ki: (b, qi, 0)),
            scratch_shapes=[
                pltpu.VMEM((tq, H), jnp.float32),  # output accumulator
                pltpu.VMEM((tq, 1), jnp.float32),  # running max m
                pltpu.VMEM((tq, 1), jnp.float32),  # running denom l
            ],
        ),
        compiler_params=pltpu.CompilerParams(
            # batch & q-tile axes parallel (feeds both TCs on v7x), kv axis arbitrary
            dimension_semantics=("parallel", "parallel", "arbitrary")),
    )(q, k, v)


def reference_forward(x, wq, wk, wv):
    """Pure-JAX reference matching the PyTorch module's forward (eval mode)."""
    B, T, C = x.shape
    q = x @ wq.T
    k = x @ wk.T
    v = x @ wv.T
    wei = (q @ jnp.swapaxes(k, -2, -1)) * (C ** -0.5)
    mask = jnp.tril(jnp.ones((T, T), dtype=bool))
    wei = jnp.where(mask[None, :, :], wei, -jnp.inf)
    wei = jax.nn.softmax(wei, axis=-1)
    return wei @ v


def _make_inputs(key, B, T, C, H):
    kx, kq, kk, kv = jax.random.split(key, 4)
    x = jax.random.normal(kx, (B, T, C), dtype=jnp.float32)
    bound = 1.0 / (C ** 0.5)  # nn.Linear default init range
    wq = jax.random.uniform(kq, (H, C), jnp.float32, -bound, bound)
    wk = jax.random.uniform(kk, (H, C), jnp.float32, -bound, bound)
    wv = jax.random.uniform(kv, (H, C), jnp.float32, -bound, bound)
    return x, wq, wk, wv


if __name__ == "__main__":
    key = jax.random.PRNGKey(0)
    k1, k2 = jax.random.split(key, 2)

    # 1) Toy shapes consistent with the module: B=2, T=8, C=32, head_size=16.
    B, T, C, H = 2, 8, 32, 16
    x, wq, wk, wv = _make_inputs(k1, B, T, C, H)
    out = jax.block_until_ready(head_forward(x, wq, wk, wv))
    ref = reference_forward(x, wq, wk, wv)
    assert out.shape == (B, T, H)
    assert jnp.allclose(out, ref, atol=5e-3, rtol=5e-3), "toy-shape mismatch vs reference"

    # 2) Larger shapes exercising flash tiling, diagonal-only masking, and the
    #    clamped (DMA-eliding) kv index map: T=512 with 256-wide tiles -> grid (2,2,2).
    B2, T2, C2, H2 = 2, 512, 64, 32
    x2, wq2, wk2, wv2 = _make_inputs(k2, B2, T2, C2, H2)
    out2 = jax.block_until_ready(head_forward(x2, wq2, wk2, wv2))
    ref2 = reference_forward(x2, wq2, wk2, wv2)
    assert out2.shape == (B2, T2, H2)
    assert jnp.allclose(out2, ref2, atol=5e-3, rtol=5e-3), "tiled-shape mismatch vs reference"

    print("KERNEL_OK")
</pallas_src>

<mosaic_0001>
module attributes {stable_mosaic.version = 11 : i64} {
  func.func @_attn_kernel(%arg0: i32, %arg1: i32, %arg2: i32, %arg3: memref<1x8x16xf32, #tpu.memory_space<vmem>>, %arg4: memref<1x8x16xf32, #tpu.memory_space<vmem>>, %arg5: memref<1x8x16xf32, #tpu.memory_space<vmem>>, %arg6: memref<1x8x16xf32, #tpu.memory_space<vmem>>, %arg7: memref<8x16xf32, #tpu.memory_space<vmem>>, %arg8: memref<8x1xf32, #tpu.memory_space<vmem>>, %arg9: memref<8x1xf32, #tpu.memory_space<vmem>>) attributes {dimension_semantics = [#tpu.dimension_semantics<parallel>, #tpu.dimension_semantics<parallel>, #tpu.dimension_semantics<arbitrary>], iteration_bounds = array<i64: 2, 1, 1>, scalar_prefetch = 0 : i64, scratch_operands = 3 : i64, tpu.core_type = #tpu.core_type<tc>, window_params = [{transform_indices = @transform_0, window_bounds = array<i64: 1, 8, 16>}, {transform_indices = @transform_1, window_bounds = array<i64: 1, 8, 16>}, {transform_indices = @transform_2, window_bounds = array<i64: 1, 8, 16>}, {transform_indices = @transform_3, window_bounds = array<i64: 1, 8, 16>}]} {
    %c0_i32 = arith.constant 0 : i32
    %0 = arith.cmpi eq, %arg2, %c0_i32 : i32
    %1 = arith.extui %0 : i1 to i32
    %c0_i32_0 = arith.constant 0 : i32
    %2 = arith.cmpi ne, %1, %c0_i32_0 : i32
    scf.if %2 {
      %cst = arith.constant -1.000000e+30 : f32
      %12 = vector.broadcast %cst : f32 to vector<8x1xf32>
      %c0 = arith.constant 0 : index
      %c0_5 = arith.constant 0 : index
      %13 = vector.load %arg8[%c0, %c0_5] : memref<8x1xf32, #tpu.memory_space<vmem>>, vector<8x1xf32>
      tpu.vector_store %arg8[%c0, %c0_5], %12 {strides = array<i32>} : memref<8x1xf32, #tpu.memory_space<vmem>>, vector<8x1xf32>,
      %cst_6 = arith.constant 0.000000e+00 : f32
      %14 = vector.broadcast %cst_6 : f32 to vector<8x1xf32>
      %c0_7 = arith.constant 0 : index
      %c0_8 = arith.constant 0 : index
      %15 = vector.load %arg9[%c0_7, %c0_8] : memref<8x1xf32, #tpu.memory_space<vmem>>, vector<8x1xf32>
      tpu.vector_store %arg9[%c0_7, %c0_8], %14 {strides = array<i32>} : memref<8x1xf32, #tpu.memory_space<vmem>>, vector<8x1xf32>,
      %cst_9 = arith.constant 0.000000e+00 : f32
      %16 = vector.broadcast %cst_9 : f32 to vector<8x16xf32>
      %c0_10 = arith.constant 0 : index
      %c0_11 = arith.constant 0 : index
      %17 = vector.load %arg7[%c0_10, %c0_11] : memref<8x16xf32, #tpu.memory_space<vmem>>, vector<8x16xf32>
      tpu.vector_store %arg7[%c0_10, %c0_11], %16 {strides = array<i32>} : memref<8x16xf32, #tpu.memory_space<vmem>>, vector<8x16xf32>,
    } else {
    }
    %3 = arith.cmpi slt, %arg2, %arg1 : i32
    %4 = arith.extui %3 : i1 to i32
    %c0_i32_1 = arith.constant 0 : i32
    %5 = arith.cmpi ne, %4, %c0_i32_1 : i32
    scf.if %5 {
      %c0 = arith.constant 0 : index
      %c0_5 = arith.constant 0 : index
      %c0_6 = arith.constant 0 : index
      %12 = vector.load %arg3[%c0, %c0_5, %c0_6] : memref<1x8x16xf32, #tpu.memory_space<vmem>>, vector<1x8x16xf32>
      %13 = vector.shape_cast %12 : vector<1x8x16xf32> to vector<8x16xf32>
      %c0_7 = arith.constant 0 : index
      %c0_8 = arith.constant 0 : index
      %c0_9 = arith.constant 0 : index
      %14 = vector.load %arg4[%c0_7, %c0_8, %c0_9] : memref<1x8x16xf32, #tpu.memory_space<vmem>>, vector<1x8x16xf32>
      %15 = vector.shape_cast %14 : vector<1x8x16xf32> to vector<8x16xf32>
      %cst = arith.constant dense<0.000000e+00> : vector<8x8xf32>
      %16 = tpu.matmul %13, %15, %cst {dimension_numbers = #tpu.dot_dimension_numbers<[1], [1], [0], [0], [0, 0, 1, 0], [], []>} : vector<8x16xf32>, vector<8x16xf32>, vector<8x8xf32> -> vector<8x8xf32>
      %c0_10 = arith.constant 0 : index
      %c0_11 = arith.constant 0 : index
      %17 = vector.load %arg8[%c0_10, %c0_11] : memref<8x1xf32, #tpu.memory_space<vmem>>, vector<8x1xf32>
      %cst_12 = arith.constant dense<0xFF800000> : vector<8xf32>
      %18 = vector.multi_reduction <maximumf>, %16, %cst_12 [1] : vector<8x8xf32> to vector<8xf32>
      %19 = vector.shape_cast %18 : vector<8xf32> to vector<8x1xf32>
      %20 = arith.maximumf %17, %19 : vector<8x1xf32>
      %21 = arith.subf %17, %20 : vector<8x1xf32>
      %22 = math.exp %21 : vector<8x1xf32>
      %23 = vector.broadcast %20 : vector<8x1xf32> to vector<8x8xf32>
      %24 = arith.subf %16, %23 : vector<8x8xf32>
      %25 = math.exp %24 : vector<8x8xf32>
      %c0_13 = arith.constant 0 : index
      %c0_14 = arith.constant 0 : index
      %26 = vector.load %arg9[%c0_13, %c0_14] : memref<8x1xf32, #tpu.memory_space<vmem>>, vector<8x1xf32>
      %27 = arith.mulf %22, %26 : vector<8x1xf32>
      %cst_15 = arith.constant dense<0.000000e+00> : vector<8xf32>
      %28 = vector.multi_reduction <add>, %25, %cst_15 [1] : vector<8x8xf32> to vector<8xf32>
      %29 = vector.shape_cast %28 : vector<8xf32> to vector<8x1xf32>
      %30 = arith.addf %27, %29 : vector<8x1xf32>
      %c0_16 = arith.constant 0 : index
      %c0_17 = arith.constant 0 : index
      %31 = vector.load %arg9[%c0_16, %c0_17] : memref<8x1xf32, #tpu.memory_space<vmem>>, vector<8x1xf32>
      tpu.vector_store %arg9[%c0_16, %c0_17], %30 {strides = array<i32>} : memref<8x1xf32, #tpu.memory_space<vmem>>, vector<8x1xf32>,
      %c0_18 = arith.constant 0 : index
      %c0_19 = arith.constant 0 : index
      %32 = vector.load %arg7[%c0_18, %c0_19] : memref<8x16xf32, #tpu.memory_space<vmem>>, vector<8x16xf32>
      %33 = vector.broadcast %22 : vector<8x1xf32> to vector<8x16xf32>
      %34 = arith.mulf %33, %32 : vector<8x16xf32>
      %c0_20 = arith.constant 0 : index
      %c0_21 = arith.constant 0 : index
      %c0_22 = arith.constant 0 : index
      %35 = vector.load %arg5[%c0_20, %c0_21, %c0_22] : memref<1x8x16xf32, #tpu.memory_space<vmem>>, vector<1x8x16xf32>
      %36 = vector.shape_cast %35 : vector<1x8x16xf32> to vector<8x16xf32>
      %cst_23 = arith.constant dense<0.000000e+00> : vector<8x16xf32>
      %37 = tpu.matmul %25, %36, %cst_23 {dimension_numbers = #tpu.dot_dimension_numbers<[1], [0], [0], [1], [0, 0, 1, 1], [], []>} : vector<8x8xf32>, vector<8x16xf32>, vector<8x16xf32> -> vector<8x16xf32>
      %38 = arith.addf %34, %37 : vector<8x16xf32>
      %c0_24 = arith.constant 0 : index
      %c0_25 = arith.constant 0 : index
      %39 = vector.load %arg7[%c0_24, %c0_25] : memref<8x16xf32, #tpu.memory_space<vmem>>, vector<8x16xf32>
      tpu.vector_store %arg7[%c0_24, %c0_25], %38 {strides = array<i32>} : memref<8x16xf32, #tpu.memory_space<vmem>>, vector<8x16xf32>,
      %c0_26 = arith.constant 0 : index
      %c0_27 = arith.constant 0 : index
      %40 = vector.load %arg8[%c0_26, %c0_27] : memref<8x1xf32, #tpu.memory_space<vmem>>, vector<8x1xf32>
      tpu.vector_store %arg8[%c0_26, %c0_27], %20 {strides = array<i32>} : memref<8x1xf32, #tpu.memory_space<vmem>>, vector<8x1xf32>,
    } else {
    }
    %6 = arith.cmpi eq, %arg2, %arg1 : i32
    %7 = arith.extui %6 : i1 to i32
    %c0_i32_2 = arith.constant 0 : i32
    %8 = arith.cmpi ne, %7, %c0_i32_2 : i32
    scf.if %8 {
      %12 = tpu.iota {dimensions = array<i32: 0>} : vector<8x8xi32>
      %13 = tpu.iota {dimensions = array<i32: 1>} : vector<8x8xi32>
      %14 = arith.cmpi sle, %13, %12 : vector<8x8xi32>
      %c0 = arith.constant 0 : index
      %c0_5 = arith.constant 0 : index
      %c0_6 = arith.constant 0 : index
      %15 = vector.load %arg3[%c0, %c0_5, %c0_6] : memref<1x8x16xf32, #tpu.memory_space<vmem>>, vector<1x8x16xf32>
      %16 = vector.shape_cast %15 : vector<1x8x16xf32> to vector<8x16xf32>
      %c0_7 = arith.constant 0 : index
      %c0_8 = arith.constant 0 : index
      %c0_9 = arith.constant 0 : index
      %17 = vector.load %arg4[%c0_7, %c0_8, %c0_9] : memref<1x8x16xf32, #tpu.memory_space<vmem>>, vector<1x8x16xf32>
      %18 = vector.shape_cast %17 : vector<1x8x16xf32> to vector<8x16xf32>
      %cst = arith.constant dense<0.000000e+00> : vector<8x8xf32>
      %19 = tpu.matmul %16, %18, %cst {dimension_numbers = #tpu.dot_dimension_numbers<[1], [1], [0], [0], [0, 0, 1, 0], [], []>} : vector<8x16xf32>, vector<8x16xf32>, vector<8x8xf32> -> vector<8x8xf32>
      %cst_10 = arith.constant -1.000000e+30 : f32
      %20 = vector.broadcast %cst_10 : f32 to vector<8x8xf32>
      %21 = arith.select %14, %19, %20 : vector<8x8xi1>, vector<8x8xf32>
      %c0_11 = arith.constant 0 : index
      %c0_12 = arith.constant 0 : index
      %22 = vector.load %arg8[%c0_11, %c0_12] : memref<8x1xf32, #tpu.memory_space<vmem>>, vector<8x1xf32>
      %cst_13 = arith.constant dense<0xFF800000> : vector<8xf32>
      %23 = vector.multi_reduction <maximumf>, %21, %cst_13 [1] : vector<8x8xf32> to vector<8xf32>
      %24 = vector.shape_cast %23 : vector<8xf32> to vector<8x1xf32>
      %25 = arith.maximumf %22, %24 : vector<8x1xf32>
      %26 = arith.subf %22, %25 : vector<8x1xf32>
      %27 = math.exp %26 : vector<8x1xf32>
      %28 = vector.broadcast %25 : vector<8x1xf32> to vector<8x8xf32>
      %29 = arith.subf %21, %28 : vector<8x8xf32>
      %30 = math.exp %29 : vector<8x8xf32>
      %c0_14 = arith.constant 0 : index
      %c0_15 = arith.constant 0 : index
      %31 = vector.load %arg9[%c0_14, %c0_15] : memref<8x1xf32, #tpu.memory_space<vmem>>, vector<8x1xf32>
      %32 = arith.mulf %27, %31 : vector<8x1xf32>
      %cst_16 = arith.constant dense<0.000000e+00> : vector<8xf32>
      %33 = vector.multi_reduction <add>, %30, %cst_16 [1] : vector<8x8xf32> to vector<8xf32>
      %34 = vector.shape_cast %33 : vector<8xf32> to vector<8x1xf32>
      %35 = arith.addf %32, %34 : vector<8x1xf32>
      %c0_17 = arith.constant 0 : index
      %c0_18 = arith.constant 0 : index
      %36 = vector.load %arg9[%c0_17, %c0_18] : memref<8x1xf32, #tpu.memory_space<vmem>>, vector<8x1xf32>
      tpu.vector_store %arg9[%c0_17, %c0_18], %35 {strides = array<i32>} : memref<8x1xf32, #tpu.memory_space<vmem>>, vector<8x1xf32>,
      %c0_19 = arith.constant 0 : index
      %c0_20 = arith.constant 0 : index
      %37 = vector.load %arg7[%c0_19, %c0_20] : memref<8x16xf32, #tpu.memory_space<vmem>>, vector<8x16xf32>
      %38 = vector.broadcast %27 : vector<8x1xf32> to vector<8x16xf32>
      %39 = arith.mulf %38, %37 : vector<8x16xf32>
      %c0_21 = arith.constant 0 : index
      %c0_22 = arith.constant 0 : index
      %c0_23 = arith.constant 0 : index
      %40 = vector.load %arg5[%c0_21, %c0_22, %c0_23] : memref<1x8x16xf32, #tpu.memory_space<vmem>>, vector<1x8x16xf32>
      %41 = vector.shape_cast %40 : vector<1x8x16xf32> to vector<8x16xf32>
      %cst_24 = arith.constant dense<0.000000e+00> : vector<8x16xf32>
      %42 = tpu.matmul %30, %41, %cst_24 {dimension_numbers = #tpu.dot_dimension_numbers<[1], [0], [0], [1], [0, 0, 1, 1], [], []>} : vector<8x8xf32>, vector<8x16xf32>, vector<8x16xf32> -> vector<8x16xf32>
      %43 = arith.addf %39, %42 : vector<8x16xf32>
      %c0_25 = arith.constant 0 : index
      %c0_26 = arith.constant 0 : index
      %44 = vector.load %arg7[%c0_25, %c0_26] : memref<8x16xf32, #tpu.memory_space<vmem>>, vector<8x16xf32>
      tpu.vector_store %arg7[%c0_25, %c0_26], %43 {strides = array<i32>} : memref<8x16xf32, #tpu.memory_space<vmem>>, vector<8x16xf32>,
      %c0_27 = arith.constant 0 : index
      %c0_28 = arith.constant 0 : index
      %45 = vector.load %arg8[%c0_27, %c0_28] : memref<8x1xf32, #tpu.memory_space<vmem>>, vector<8x1xf32>
      tpu.vector_store %arg8[%c0_27, %c0_28], %25 {strides = array<i32>} : memref<8x1xf32, #tpu.memory_space<vmem>>, vector<8x1xf32>,
    } else {
    }
    %c0_i32_3 = arith.constant 0 : i32
    %9 = arith.cmpi eq, %arg2, %c0_i32_3 : i32
    %10 = arith.extui %9 : i1 to i32
    %c0_i32_4 = arith.constant 0 : i32
    %11 = arith.cmpi ne, %10, %c0_i32_4 : i32
    scf.if %11 {
      %c0 = arith.constant 0 : index
      %c0_5 = arith.constant 0 : index
      %12 = vector.load %arg9[%c0, %c0_5] : memref<8x1xf32, #tpu.memory_space<vmem>>, vector<8x1xf32>
      %13 = tpu.reciprocal %12 {approx = true} : vector<8x1xf32> -> vector<8x1xf32>
      %c0_6 = arith.constant 0 : index
      %c0_7 = arith.constant 0 : index
      %14 = vector.load %arg7[%c0_6, %c0_7] : memref<8x16xf32, #tpu.memory_space<vmem>>, vector<8x16xf32>
      %15 = vector.broadcast %13 : vector<8x1xf32> to vector<8x16xf32>
      %16 = arith.mulf %14, %15 : vector<8x16xf32>
      %c0_8 = arith.constant 0 : index
      %c0_9 = arith.constant 0 : index
      %c0_10 = arith.constant 0 : index
      %17 = vector.load %arg6[%c0_8, %c0_9, %c0_10] : memref<1x8x16xf32, #tpu.memory_space<vmem>>, vector<1x8x16xf32>
      %18 = vector.shape_cast %17 : vector<1x8x16xf32> to vector<8x16xf32>
      %19 = vector.shape_cast %16 : vector<8x16xf32> to vector<1x8x16xf32>
      tpu.vector_store %arg6[%c0_8, %c0_9, %c0_10], %19 {strides = array<i32>} : memref<1x8x16xf32, #tpu.memory_space<vmem>>, vector<1x8x16xf32>,
    } else {
    }
    return
  }
  func.func @transform_0(%arg0: i32, %arg1: i32, %arg2: i32) -> (i32, i32, i32) {
    %c0_i32 = arith.constant 0 : i32
    %c0_i32_0 = arith.constant 0 : i32
    return %arg0, %arg1, %c0_i32 : i32, i32, i32
  }
  func.func @transform_1(%arg0: i32, %arg1: i32, %arg2: i32) -> (i32, i32, i32) {
    %0 = arith.minsi %arg2, %arg1 : i32
    %c0_i32 = arith.constant 0 : i32
    %c0_i32_0 = arith.constant 0 : i32
    return %arg0, %0, %c0_i32 : i32, i32, i32
  }
  func.func @transform_2(%arg0: i32, %arg1: i32, %arg2: i32) -> (i32, i32, i32) {
    %0 = arith.minsi %arg2, %arg1 : i32
    %c0_i32 = arith.constant 0 : i32
    %c0_i32_0 = arith.constant 0 : i32
    return %arg0, %0, %c0_i32 : i32, i32, i32
  }
  func.func @transform_3(%arg0: i32, %arg1: i32, %arg2: i32) -> (i32, i32, i32) {
    %c0_i32 = arith.constant 0 : i32
    %c0_i32_0 = arith.constant 0 : i32
    return %arg0, %arg1, %c0_i32 : i32, i32, i32
  }
}

module attributes {stable_mosaic.version = 11 : i64} {
  func.func @_qkv_proj_kernel(%arg0: i32, %arg1: i32, %arg2: memref<1x8x32xf32, #tpu.memory_space<vmem>>, %arg3: memref<32x48xf32, #tpu.memory_space<vmem>>, %arg4: memref<1x8x16xf32, #tpu.memory_space<vmem>>, %arg5: memref<1x8x16xf32, #tpu.memory_space<vmem>>, %arg6: memref<1x8x16xf32, #tpu.memory_space<vmem>>) attributes {dimension_semantics = [#tpu.dimension_semantics<parallel>, #tpu.dimension_semantics<parallel>], iteration_bounds = array<i64: 2, 1>, scalar_prefetch = 0 : i64, scratch_operands = 0 : i64, tpu.core_type = #tpu.core_type<tc>, window_params = [{transform_indices = @transform_0, window_bounds = array<i64: 1, 8, 32>}, {pipeline_mode = #tpu.pipeline_mode<synchronous>, transform_indices = @transform_1, window_bounds = array<i64: 32, 48>}, {transform_indices = @transform_2, window_bounds = array<i64: 1, 8, 16>}, {transform_indices = @transform_3, window_bounds = array<i64: 1, 8, 16>}, {transform_indices = @transform_4, window_bounds = array<i64: 1, 8, 16>}]} {
    %c0 = arith.constant 0 : index
    %c0_0 = arith.constant 0 : index
    %c0_1 = arith.constant 0 : index
    %0 = vector.load %arg2[%c0, %c0_0, %c0_1] : memref<1x8x32xf32, #tpu.memory_space<vmem>>, vector<1x8x32xf32>
    %1 = vector.shape_cast %0 : vector<1x8x32xf32> to vector<8x32xf32>
    %c0_2 = arith.constant 0 : index
    %c0_3 = arith.constant 0 : index
    %2 = vector.load %arg3[%c0_2, %c0_3] : memref<32x48xf32, #tpu.memory_space<vmem>>, vector<32x48xf32>
    %cst = arith.constant dense<0.000000e+00> : vector<8x48xf32>
    %3 = tpu.matmul %1, %2, %cst {dimension_numbers = #tpu.dot_dimension_numbers<[1], [0], [0], [1], [0, 0, 1, 1], [], []>} : vector<8x32xf32>, vector<32x48xf32>, vector<8x48xf32> -> vector<8x48xf32>
    %4 = vector.extract_strided_slice %3 {offsets = [0, 0], sizes = [8, 16], strides = [1, 1]} : vector<8x48xf32> to vector<8x16xf32>
    %c0_4 = arith.constant 0 : index
    %c0_5 = arith.constant 0 : index
    %c0_6 = arith.constant 0 : index
    %5 = vector.load %arg4[%c0_4, %c0_5, %c0_6] : memref<1x8x16xf32, #tpu.memory_space<vmem>>, vector<1x8x16xf32>
    %6 = vector.shape_cast %5 : vector<1x8x16xf32> to vector<8x16xf32>
    %7 = vector.shape_cast %4 : vector<8x16xf32> to vector<1x8x16xf32>
    tpu.vector_store %arg4[%c0_4, %c0_5, %c0_6], %7 {strides = array<i32>} : memref<1x8x16xf32, #tpu.memory_space<vmem>>, vector<1x8x16xf32>,
    %8 = vector.extract_strided_slice %3 {offsets = [0, 16], sizes = [8, 16], strides = [1, 1]} : vector<8x48xf32> to vector<8x16xf32>
    %c0_7 = arith.constant 0 : index
    %c0_8 = arith.constant 0 : index
    %c0_9 = arith.constant 0 : index
    %9 = vector.load %arg5[%c0_7, %c0_8, %c0_9] : memref<1x8x16xf32, #tpu.memory_space<vmem>>, vector<1x8x16xf32>
    %10 = vector.shape_cast %9 : vector<1x8x16xf32> to vector<8x16xf32>
    %11 = vector.shape_cast %8 : vector<8x16xf32> to vector<1x8x16xf32>
    tpu.vector_store %arg5[%c0_7, %c0_8, %c0_9], %11 {strides = array<i32>} : memref<1x8x16xf32, #tpu.memory_space<vmem>>, vector<1x8x16xf32>,
    %12 = vector.extract_strided_slice %3 {offsets = [0, 32], sizes = [8, 16], strides = [1, 1]} : vector<8x48xf32> to vector<8x16xf32>
    %c0_10 = arith.constant 0 : index
    %c0_11 = arith.constant 0 : index
    %c0_12 = arith.constant 0 : index
    %13 = vector.load %arg6[%c0_10, %c0_11, %c0_12] : memref<1x8x16xf32, #tpu.memory_space<vmem>>, vector<1x8x16xf32>
    %14 = vector.shape_cast %13 : vector<1x8x16xf32> to vector<8x16xf32>
    %15 = vector.shape_cast %12 : vector<8x16xf32> to vector<1x8x16xf32>
    tpu.vector_store %arg6[%c0_10, %c0_11, %c0_12], %15 {strides = array<i32>} : memref<1x8x16xf32, #tpu.memory_space<vmem>>, vector<1x8x16xf32>,
    return
  }
  func.func @transform_0(%arg0: i32, %arg1: i32) -> (i32, i32, i32) {
    %c0_i32 = arith.constant 0 : i32
    %c0_i32_0 = arith.constant 0 : i32
    return %arg0, %arg1, %c0_i32 : i32, i32, i32
  }
  func.func @transform_1(%arg0: i32, %arg1: i32) -> (i32, i32) {
    %c0_i32 = arith.constant 0 : i32
    %c0_i32_0 = arith.constant 0 : i32
    %c0_i32_1 = arith.constant 0 : i32
    return %c0_i32, %c0_i32_0 : i32, i32
  }
  func.func @transform_2(%arg0: i32, %arg1: i32) -> (i32, i32, i32) {
    %c0_i32 = arith.constant 0 : i32
    %c0_i32_0 = arith.constant 0 : i32
    return %arg0, %arg1, %c0_i32 : i32, i32, i32
  }
  func.func @transform_3(%arg0: i32, %arg1: i32) -> (i32, i32, i32) {
    %c0_i32 = arith.constant 0 : i32
    %c0_i32_0 = arith.constant 0 : i32
    return %arg0, %arg1, %c0_i32 : i32, i32, i32
  }
  func.func @transform_4(%arg0: i32, %arg1: i32) -> (i32, i32, i32) {
    %c0_i32 = arith.constant 0 : i32
    %c0_i32_0 = arith.constant 0 : i32
    return %arg0, %arg1, %c0_i32 : i32, i32, i32
  }
}

</mosaic_0001>

<llo_original>
// kernel: head_forward.2
$region0: #{head_forward.2}
  #allocation0 [shape = 'u32[]', space=smem, size = 0x4, offset = 0x4, fixed_abs, tag = 'smem constant byte address 0x4 - core index']
  #allocation1 [shape = 'u32[144,128]{1,0:T(1,128)}', space=vmem, size = 0x12000, scoped, tag = 'internal scratch']
  %s0 = inlined_call_operand.vmem [shape: f32[2,8,32], index: 0, kind: input, shape index: {}]
  %s1 = inlined_call_operand.vmem [shape: f32[32,48], index: 1, kind: input, shape index: {}]
  %s2 = inlined_call_operand.vmem [shape: f32[2,8,16], index: 2, kind: output, shape index: {0}]
  %s3 = inlined_call_operand.vmem [shape: f32[2,8,16], index: 3, kind: output, shape index: {1}]
  %s4 = inlined_call_operand.vmem [shape: f32[2,8,16], index: 4, kind: output, shape index: {2}]
  %5 = xla_tuple %s2, %s3, %s4
  %s6 = sld [smem:[#allocation0]]
  $region57: #{head_forward.2} parent=0
    _
  %s8 = ssub.s32 1, %s6
  %s9 = scalar_select 0, %s8, %s6
  loop: start=0, step=1, limit=4
  $region2: #{head_forward.2} parent=0 // loop_pre_header
    _
  $region3: #{head_forward.2} parent=0 // loop_header
    %s11 = sphi 0, %s15
    %p12 = scmp.ge.s32.totalorder %s11, 4
    %s18 = sphi 0, %s30
    %s19 = sphi 0, %s26
    %s20 = sphi 0, %s18
    %s21 = sphi 0, %s19
    %s22 = sphi 0, %s20
    %s23 = sphi 0, %s21
    %s35 = sphi 0, %s37
    %s38 = sphi 0, %s35
    %s39 = sphi 0, %s38
    %s55 = sphi 0, %s39
    %s59 = sphi 0, %s59
    %s61 = sphi 0, %s59
    %s62 = sphi 0, %s61
    %s76 = sphi 0, %s62
    %s84 = sphi 0, %s86
    %s87 = sphi 0, %s84
    %s88 = sphi 0, %s87
    %s104 = sphi 0, %s88
    %s112 = sphi 0, %s114
    %s115 = sphi 0, %s112
    %s116 = sphi 0, %s115
    %s132 = sphi 0, %s116
    %s140 = sphi 0, %s142
    %s143 = sphi 0, %s140
    %s144 = sphi 0, %s143
    %s160 = sphi 0, %s144
  $region4: #{head_forward.2} parent=0 // loop_header_branch
    %14 = sbr.rel (%p12) target = $region8
  $region5: #{head_forward.2} parent=0 // loop_body
    %s16 = ssub.s32 %s11, 1
    %s17 = ssub.s32 %s11, 2
    %s24 = sadd.s32 1, %s19
    %p25 = scmp.ge.s32.totalorder %s24, 1
    %s26 = scalar_select %p25, 0, %s24
    %s27 = sadd.s32 1, %s18
    %s28 = scalar_select %p25, %s27, %s18
    %p29 = scmp.ge.s32.totalorder %s28, 2
    %s30 = scalar_select %p29, 0, %s28
    %s31 = ssub.s32 %s18, %s30
    %s32 = ssub.s32 %s19, %s26
    %s33 = sor.u32 %s31, %s32
    %p34 = scmp.eq.s32.totalorder %s33, 0
    %s36 = sadd.s32 %s35, 1
    %s37 = scalar_select %p34, %s35, %s36
    %p40 = pneg %p34
    %p41 = scmp.eq.s32.totalorder %s11, 1
    %p42 = por %p40, %p41
    %p43 = scmp.ne.s32.totalorder %s35, %s38
    %p44 = scmp.eq.s32.totalorder %s11, 0
    %p45 = por %p43, %p44
    %p46 = scmp.ne.s32.totalorder %s35, %s38
    %p47 = scmp.eq.s32.totalorder %s16, 1
    %p48 = por %p46, %p47
    %p49 = scmp.ne.s32.totalorder %s38, %s39
    %p50 = scmp.eq.s32.totalorder %s16, 0
    %p51 = por %p49, %p50
    %p52 = scmp.ne.s32.totalorder %s38, %s39
    %p53 = scmp.eq.s32.totalorder %s17, 1
    %p54 = por %p52, %p53
    %p56 = scmp.ne.s32.totalorder %s39, %s55
    %p57 = scmp.eq.s32.totalorder %s17, 0
    %p58 = por %p56, %p57
    %s60 = sadd.s32 %s59, 1
    %p63 = scmp.eq.s32.totalorder %s11, 1
    %p64 = scmp.ne.s32.totalorder %s59, %s61
    %p65 = scmp.eq.s32.totalorder %s11, 0
    %p66 = por %p64, %p65
    %p67 = scmp.ne.s32.totalorder %s59, %s61
    %p68 = scmp.eq.s32.totalorder %s16, 1
    %p69 = por %p67, %p68
    %p70 = scmp.ne.s32.totalorder %s61, %s62
    %p71 = scmp.eq.s32.totalorder %s16, 0
    %p72 = por %p70, %p71
    %p73 = scmp.ne.s32.totalorder %s61, %s62
    %p74 = scmp.eq.s32.totalorder %s17, 1
    %p75 = por %p73, %p74
    %p77 = scmp.ne.s32.totalorder %s62, %s76
    %p78 = scmp.eq.s32.totalorder %s17, 0
    %p79 = por %p77, %p78
    %s80 = ssub.s32 %s18, %s30
    %s81 = ssub.s32 %s19, %s26
    %s82 = sor.u32 %s80, %s81
    %p83 = scmp.eq.s32.totalorder %s82, 0
    %s85 = sadd.s32 %s84, 1
    %s86 = scalar_select %p83, %s84, %s85
    %p89 = pneg %p83
    %p90 = scmp.eq.s32.totalorder %s11, 1
    %p91 = por %p89, %p90
    %p92 = scmp.ne.s32.totalorder %s84, %s87
    %p93 = scmp.eq.s32.totalorder %s11, 0
    %p94 = por %p92, %p93
    %p95 = scmp.ne.s32.totalorder %s84, %s87
    %p96 = scmp.eq.s32.totalorder %s16, 1
    %p97 = por %p95, %p96
    %p98 = scmp.ne.s32.totalorder %s87, %s88
    %p99 = scmp.eq.s32.totalorder %s16, 0
    %p100 = por %p98, %p99
    %p101 = scmp.ne.s32.totalorder %s87, %s88
    %p102 = scmp.eq.s32.totalorder %s17, 1
    %p103 = por %p101, %p102
    %p105 = scmp.ne.s32.totalorder %s88, %s104
    %p106 = scmp.eq.s32.totalorder %s17, 0
    %p107 = por %p105, %p106
    %s108 = ssub.s32 %s18, %s30
    %s109 = ssub.s32 %s19, %s26
    %s110 = sor.u32 %s108, %s109
    %p111 = scmp.eq.s32.totalorder %s110, 0
    %s113 = sadd.s32 %s112, 1
    %s114 = scalar_select %p111, %s112, %s113
    %p117 = pneg %p111
    %p118 = scmp.eq.s32.totalorder %s11, 1
    %p119 = por %p117, %p118
    %p120 = scmp.ne.s32.totalorder %s112, %s115
    %p121 = scmp.eq.s32.totalorder %s11, 0
    %p122 = por %p120, %p121
    %p123 = scmp.ne.s32.totalorder %s112, %s115
    %p124 = scmp.eq.s32.totalorder %s16, 1
    %p125 = por %p123, %p124
    %p126 = scmp.ne.s32.totalorder %s115, %s116
    %p127 = scmp.eq.s32.totalorder %s16, 0
    %p128 = por %p126, %p127
    %p129 = scmp.ne.s32.totalorder %s115, %s116
    %p130 = scmp.eq.s32.totalorder %s17, 1
    %p131 = por %p129, %p130
    %p133 = scmp.ne.s32.totalorder %s116, %s132
    %p134 = scmp.eq.s32.totalorder %s17, 0
    %p135 = por %p133, %p134
    %s136 = ssub.s32 %s18, %s30
    %s137 = ssub.s32 %s19, %s26
    %s138 = sor.u32 %s136, %s137
    %p139 = scmp.eq.s32.totalorder %s138, 0
    %s141 = sadd.s32 %s140, 1
    %s142 = scalar_select %p139, %s140, %s141
    %p145 = pneg %p139
    %p146 = scmp.eq.s32.totalorder %s11, 1
    %p147 = por %p145, %p146
    %p148 = scmp.ne.s32.totalorder %s140, %s143
    %p149 = scmp.eq.s32.totalorder %s11, 0
    %p150 = por %p148, %p149
    %p151 = scmp.ne.s32.totalorder %s140, %s143
    %p152 = scmp.eq.s32.totalorder %s16, 1
    %p153 = por %p151, %p152
    %p154 = scmp.ne.s32.totalorder %s143, %s144
    %p155 = scmp.eq.s32.totalorder %s16, 0
    %p156 = por %p154, %p155
    %p157 = scmp.ne.s32.totalorder %s143, %s144
    %p158 = scmp.eq.s32.totalorder %s17, 1
    %p159 = por %p157, %p158
    %p161 = scmp.ne.s32.totalorder %s144, %s160
    %p162 = scmp.eq.s32.totalorder %s17, 0
    %p163 = por %p161, %p162
    %p164 = scmp.le.s32.totalorder 1, %s11
    %p165 = scmp.lt.s32.totalorder %s11, 3
    %p166 = pnand %p164, %p165
    %p167 = pneg %p166
    // Predicated region
    $region9: #{head_forward.2} parent=5 // pred_check
      _
    $region10: #{head_forward.2} parent=5 // pred_check_branch
      %169 = sbr.rel (%p166) target = $region12
    $region11: #{head_forward.2} parent=5 // pred_region
      %s170 = ssub.s32 %s11, 1
      // Predicated region
      $region13: #{head_forward.2} parent=11 // pred_check
        %p171 = pneg %p72
      $region14: #{head_forward.2} parent=11 // pred_check_branch
        %173 = sbr.rel (%p171) target = $region16
      $region15: #{head_forward.2} parent=11 // pred_region
        _
      $region16: #{head_forward.2} parent=11 // pred_fallthru
        _
    $region12: #{head_forward.2} parent=5 // pred_fallthru
      _
    %p174 = scmp.lt.s32.totalorder %s11, 2
    // Predicated region
    $region17: #{head_forward.2} parent=5 // pred_check
      %p175 = pneg %p174
    $region18: #{head_forward.2} parent=5 // pred_check_branch
      %177 = sbr.rel (%p175) target = $region20
    $region19: #{head_forward.2} parent=5 // pred_region
      // Predicated region
      $region21: #{head_forward.2} parent=19 // pred_check
        %p178 = pneg %p45
      $region22: #{head_forward.2} parent=19 // pred_check_branch
        %180 = sbr.rel (%p178) target = $region24
      $region23: #{head_forward.2} parent=19 // pred_region
        %p181 = scmp.lt.s32.totalorder %s18, 1
        %s182 = scalar_select %p181, %s18, 1
        %p183 = scmp.lt.s32.totalorder %s19, 0
        %s184 = scalar_select %p183, %s19, 0
        %s185 = sadd.s32 %s184, %s182
        %s186 = smul.addr %s185, 8
        %s187 = scalar_lea.vmem %s0, %s186
      $region24: #{head_forward.2} parent=19 // pred_fallthru
        _
    $region20: #{head_forward.2} parent=5 // pred_fallthru
      _
    %p188 = scmp.le.s32.totalorder 1, %s11
    %p189 = scmp.lt.s32.totalorder %s11, 3
    %p190 = pnand %p188, %p189
    %p191 = pneg %p190
    // Predicated region
    $region25: #{head_forward.2} parent=5 // pred_check
      _
    $region26: #{head_forward.2} parent=5 // pred_check_branch
      %193 = sbr.rel (%p190) target = $region28
    $region27: #{head_forward.2} parent=5 // pred_region
      %s194 = ssub.s32 %s11, 1
      %p195 = scmp.lt.s32.totalorder %s20, 1
      %s196 = scalar_select %p195, %s20, 1
      %p197 = scmp.lt.s32.totalorder %s21, 0
      %s198 = scalar_select %p197, %s21, 0
      %s199 = sadd.s32 %s198, %s196
      %s200 = smul.addr %s199, 8
      %s201 = scalar_lea.vmem %s0, %s200
      %p202 = pneg %p51
      %p203 = pneg %p48
      %p204 = pneg %p72
      %p205 = pneg %p69
      %p206 = pneg %p100
      %p207 = pneg %p97
      %p208 = scmp.lt.s32.totalorder %s20, 1
      %s209 = scalar_select %p208, %s20, 1
      %p210 = scmp.lt.s32.totalorder %s21, 0
      %s211 = scalar_select %p210, %s21, 0
      %s212 = sadd.s32 %s211, %s209
      %s213 = smul.addr %s212, 8
      %s214 = scalar_lea.vmem %s2, %s213
      %p215 = pneg %p128
      %p216 = pneg %p125
      %p217 = scmp.lt.s32.totalorder %s20, 1
      %s218 = scalar_select %p217, %s20, 1
      %p219 = scmp.lt.s32.totalorder %s21, 0
      %s220 = scalar_select %p219, %s21, 0
      %s221 = sadd.s32 %s220, %s218
      %s222 = smul.addr %s221, 8
      %s223 = scalar_lea.vmem %s3, %s222
      %p224 = pneg %p156
      %p225 = pneg %p153
      %p226 = scmp.lt.s32.totalorder %s20, 1
      %s227 = scalar_select %p226, %s20, 1
      %p228 = scmp.lt.s32.totalorder %s21, 0
      %s229 = scalar_select %p228, %s21, 0
      %s230 = sadd.s32 %s229, %s227
      %s231 = smul.addr %s230, 8
      %s232 = scalar_lea.vmem %s4, %s231
      %p233 = scmp.lt.s32.totalorder %s20, 1
      %s234 = scalar_select %p233, %s20, 1
      %p235 = scmp.lt.s32.totalorder %s21, 0
      %s236 = scalar_select %p235, %s21, 0
      %s237 = sadd.s32 %s236, %s234
      %s238 = smul.addr %s237, 8
      %s239 = scalar_lea.vmem %s0, %s238
      %p240 = scmp.lt.s32.totalorder %s20, 1
      %s241 = scalar_select %p240, %s20, 1
      %p242 = scmp.lt.s32.totalorder %s21, 0
      %s243 = scalar_select %p242, %s21, 0
      %s244 = sadd.s32 %s243, %s241
      %s245 = smul.addr %s244, 8
      %s246 = scalar_lea.vmem %s2, %s245
      %p247 = scmp.lt.s32.totalorder %s20, 1
      %s248 = scalar_select %p247, %s20, 1
      %p249 = scmp.lt.s32.totalorder %s21, 0
      %s250 = scalar_select %p249, %s21, 0
      %s251 = sadd.s32 %s250, %s248
      %s252 = smul.addr %s251, 8
      %s253 = scalar_lea.vmem %s3, %s252
      %p254 = scmp.lt.s32.totalorder %s20, 1
      %s255 = scalar_select %p254, %s20, 1
      %p256 = scmp.lt.s32.totalorder %s21, 0
      %s257 = scalar_select %p256, %s21, 0
      %s258 = sadd.s32 %s257, %s255
      %s259 = smul.addr %s258, 8
      %s260 = scalar_lea.vmem %s4, %s259
      %v261 = vld [vmem:[%s239] sm:$0xff]
      %v262 = vld [vmem:[%s1] sm:$0xff]
      %v263 = vld [vmem:[%s1 + $0x8] sm:$0xff]
      %v264 = vld [vmem:[%s1 + $0x10] sm:$0xff]
      %v265 = vld [vmem:[%s1 + $0x18] sm:$0xff]
      %vm266 = vcmask 261120
      %v268 = vsel %vm266, %v261, 0
      %270 = vmatprep.subr.mxu0 0.0
      %271 = vmatpush1.msra.mxu0 %v262
      %272 = vmatprep.subr.mxu0 0.0
      %273 = vmatpush1.msra.mxu0 %v263
      %274 = vmatprep.subr.mxu0 0.0
      %275 = vmatpush1.msra.mxu0 %v264
      %276 = vmatprep.subr.mxu0 0.0
      %277 = vmatpush1.msra.mxu0 %v265
      %278 = vmatprep.subr.mxu0 0.0
      %279 = vmatpush1.msra.mxu0 0.0
      %280 = vmatprep.subr.mxu0 0.0
      %281 = vmatpush1.msra.mxu0 0.0
      %282 = vmatprep.subr.mxu0 0.0
      %283 = vmatpush1.msra.mxu0 0.0
      %284 = vmatprep.subr.mxu0 0.0
      %285 = vmatpush1.msra.mxu0 0.0
      %286 = vmatprep.subr.mxu0 0.0
      %287 = vmatpush1.msra.mxu0 0.0
      %288 = vmatprep.subr.mxu0 0.0
      %289 = vmatpush1.msra.mxu0 0.0
      %290 = vmatprep.subr.mxu0 0.0
      %291 = vmatpush1.msra.mxu0 0.0
      %292 = vmatprep.subr.mxu0 0.0
      %293 = vmatpush1.msra.mxu0 0.0
      %294 = vmatprep.subr.mxu0 0.0
      %295 = vmatpush1.msra.mxu0 0.0
      %296 = vmatprep.subr.mxu0 0.0
      %297 = vmatpush1.msra.mxu0 0.0
      %298 = vmatprep.subr.mxu0 0.0
      %299 = vmatpush1.msra.mxu0 0.0
      %300 = vmatprep.subr.mxu0 0.0
      %301 = vmatpush1.msra.mxu0 0.0
      %302 = vmatprep.subr.mxu0 0.0
      %303 = vmatpush1.msra.mxu0 0.0
      %304 = vmatprep.subr.mxu0 0.0
      %305 = vmatpush1.msra.mxu0 0.0
      %306 = vmatprep.subr.mxu0 0.0
      %307 = vmatpush1.msra.mxu0 0.0
      %308 = vmatprep.subr.mxu0 0.0
      %309 = vmatpush1.msra.mxu0 0.0
      %310 = vmatprep.subr.mxu0 0.0
      %311 = vmatpush1.msra.mxu0 0.0
      %312 = vmatprep.subr.mxu0 0.0
      %313 = vmatpush1.msra.mxu0 0.0
      %314 = vmatprep.subr.mxu0 0.0
      %315 = vmatpush1.msra.mxu0 0.0
      %316 = vmatprep.subr.mxu0 0.0
      %317 = vmatpush1.msra.mxu0 0.0
      %318 = vmatprep.subr.mxu0 0.0
      %319 = vmatpush1.msra.mxu0 0.0
      %320 = vmatprep.subr.mxu0 0.0
      %321 = vmatpush1.msra.mxu0 0.0
      %322 = vmatprep.subr.mxu0 0.0
      %323 = vmatpush1.msra.mxu0 0.0
      %324 = vmatprep.subr.mxu0 0.0
      %325 = vmatpush1.msra.mxu0 0.0
      %326 = vmatprep.subr.mxu0 0.0
      %327 = vmatpush1.msra.mxu0 0.0
      %328 = vmatprep.subr.mxu0 0.0
      %329 = vmatpush1.msra.mxu0 0.0
      %330 = vmatprep.subr.mxu0 0.0
      %331 = vmatpush1.msra.mxu0 0.0
      %332 = vmatprep.subr.mxu0 0.0
      %333 = vmatpush1.msra.mxu0 0.0
      %334 = vmatprep.mubr.f32.mxu0 0.0
      %335 = vmatmul.mubr.f32.gmra.mrb[0].mxu0 %v268
      %v336 = vpop.f32.mrb[0].mxu0
      %v337 = vadd.f32 0.0, %v336
      %v338 = vpop.f32.mrb[0].mxu0
      %339 = vdwg.mxu0
      %vm340 = vcmask 130048
      %341 = vst.msk [vmem:[%s246] sm:$0xff] %vm340, %v337
      %343 = vrot.lane.b32.xlu0 %v337, 112
      %v344 = vpop.permute.xlu0 %343
      %346 = vst.msk [vmem:[%s253] sm:$0xff] %vm340, %v344
      %347 = vrot.lane.b32.xlu0 %v337, 96
      %v348 = vpop.permute.xlu0 %347
      %350 = vst.msk [vmem:[%s260] sm:$0xff] %vm340, %v348
      %p351 = scmp.lt.s32.totalorder %s20, 1
      %s352 = scalar_select %p351, %s20, 1
      %p353 = scmp.lt.s32.totalorder %s21, 0
      %s354 = scalar_select %p353, %s21, 0
      %s355 = sadd.s32 %s354, %s352
      %s356 = smul.addr %s355, 8
      %s357 = scalar_lea.vmem %s2, %s356
      %p358 = scmp.lt.s32.totalorder %s20, 1
      %s359 = scalar_select %p358, %s20, 1
      %p360 = scmp.lt.s32.totalorder %s21, 0
      %s361 = scalar_select %p360, %s21, 0
      %s362 = sadd.s32 %s361, %s359
      %s363 = smul.addr %s362, 8
      %s364 = scalar_lea.vmem %s3, %s363
      %p365 = scmp.lt.s32.totalorder %s20, 1
      %s366 = scalar_select %p365, %s20, 1
      %p367 = scmp.lt.s32.totalorder %s21, 0
      %s368 = scalar_select %p367, %s21, 0
      %s369 = sadd.s32 %s368, %s366
      %s370 = smul.addr %s369, 8
      %s371 = scalar_lea.vmem %s4, %s370
      // Predicated region
      $region29: #{head_forward.2} parent=27 // pred_check
        %p372 = pneg %p97
      $region30: #{head_forward.2} parent=27 // pred_check_branch
        %374 = sbr.rel (%p372) target = $region32
      $region31: #{head_forward.2} parent=27 // pred_region
        _
      $region32: #{head_forward.2} parent=27 // pred_fallthru
        _
      // Predicated region
      $region33: #{head_forward.2} parent=27 // pred_check
        %p375 = pneg %p125
      $region34: #{head_forward.2} parent=27 // pred_check_branch
        %377 = sbr.rel (%p375) target = $region36
      $region35: #{head_forward.2} parent=27 // pred_region
        _
      $region36: #{head_forward.2} parent=27 // pred_fallthru
        _
      // Predicated region
      $region37: #{head_forward.2} parent=27 // pred_check
        %p378 = pneg %p153
      $region38: #{head_forward.2} parent=27 // pred_check_branch
        %380 = sbr.rel (%p378) target = $region40
      $region39: #{head_forward.2} parent=27 // pred_region
        _
      $region40: #{head_forward.2} parent=27 // pred_fallthru
        _
    $region28: #{head_forward.2} parent=5 // pred_fallthru
      _
    %p381 = scmp.le.s32.totalorder 2, %s11
    // Predicated region
    $region41: #{head_forward.2} parent=5 // pred_check
      %p382 = pneg %p381
    $region42: #{head_forward.2} parent=5 // pred_check_branch
      %384 = sbr.rel (%p382) target = $region44
    $region43: #{head_forward.2} parent=5 // pred_region
      %s385 = ssub.s32 %s11, 2
      // Predicated region
      $region45: #{head_forward.2} parent=43 // pred_check
        %p386 = pneg %p103
      $region46: #{head_forward.2} parent=43 // pred_check_branch
        %388 = sbr.rel (%p386) target = $region48
      $region47: #{head_forward.2} parent=43 // pred_region
        %p389 = scmp.lt.s32.totalorder %s22, 1
        %s390 = scalar_select %p389, %s22, 1
        %p391 = scmp.lt.s32.totalorder %s23, 0
        %s392 = scalar_select %p391, %s23, 0
        %s393 = sadd.s32 %s392, %s390
        %s394 = smul.addr %s393, 8
        %s395 = scalar_lea.vmem %s2, %s394
      $region48: #{head_forward.2} parent=43 // pred_fallthru
        _
      // Predicated region
      $region49: #{head_forward.2} parent=43 // pred_check
        %p396 = pneg %p131
      $region50: #{head_forward.2} parent=43 // pred_check_branch
        %398 = sbr.rel (%p396) target = $region52
      $region51: #{head_forward.2} parent=43 // pred_region
        %p399 = scmp.lt.s32.totalorder %s22, 1
        %s400 = scalar_select %p399, %s22, 1
        %p401 = scmp.lt.s32.totalorder %s23, 0
        %s402 = scalar_select %p401, %s23, 0
        %s403 = sadd.s32 %s402, %s400
        %s404 = smul.addr %s403, 8
        %s405 = scalar_lea.vmem %s3, %s404
      $region52: #{head_forward.2} parent=43 // pred_fallthru
        _
      // Predicated region
      $region53: #{head_forward.2} parent=43 // pred_check
        %p406 = pneg %p159
      $region54: #{head_forward.2} parent=43 // pred_check_branch
        %408 = sbr.rel (%p406) target = $region56
      $region55: #{head_forward.2} parent=43 // pred_region
        %p409 = scmp.lt.s32.totalorder %s22, 1
        %s410 = scalar_select %p409, %s22, 1
        %p411 = scmp.lt.s32.totalorder %s23, 0
        %s412 = scalar_select %p411, %s23, 0
        %s413 = sadd.s32 %s412, %s410
        %s414 = smul.addr %s413, 8
        %s415 = scalar_lea.vmem %s4, %s414
      $region56: #{head_forward.2} parent=43 // pred_fallthru
        _
    $region44: #{head_forward.2} parent=5 // pred_fallthru
      _
  $region6: #{head_forward.2} parent=0 // loop_footer
    %s15 = sadd.s32 1, %s11
  $region7: #{head_forward.2} parent=0 // loop_footer_branch
    %10 = sbr.rel target = $region3
  $region8: #{head_forward.2} parent=0 // loop_exit
    _

// kernel: head_forward.3
$region0: #{head_forward.3}
  #allocation0 [shape = 'u32[]', space=smem, size = 0x4, offset = 0x4, fixed_abs, tag = 'smem constant byte address 0x4 - core index']
  #allocation1 [shape = 'u32[144,128]{1,0:T(1,128)}', space=vmem, size = 0x12000, scoped, tag = 'internal scratch']
  #allocation2 [shape = 'f32[8,16]{1,0:T(8,128)}', space=vmem, size = 0x1000, scoped, tag = 'scratch operand']
  #allocation3 [shape = 'f32[8,1]{1,0:T(8,128)}', space=vmem, size = 0x1000, scoped, tag = 'scratch operand']
  #allocation4 [shape = 'f32[8,1]{1,0:T(8,128)}', space=vmem, size = 0x1000, scoped, tag = 'scratch operand']
  %s0 = inlined_call_operand.vmem [shape: f32[2,8,16], index: 0, kind: input, shape index: {}]
  %s1 = inlined_call_operand.vmem [shape: f32[2,8,16], index: 1, kind: input, shape index: {}]
  %s2 = inlined_call_operand.vmem [shape: f32[2,8,16], index: 2, kind: input, shape index: {}]
  %s3 = inlined_call_operand.hbm [shape: f32[2,8,16], index: 3, kind: output, shape index: {}]
  %s4 = sld [smem:[#allocation0]]
  $region61: #{head_forward.3} parent=0
    _
  %s6 = ssub.s32 1, %s4
  %s7 = scalar_select 0, %s6, %s4
  $region1: #{head_forward.3} parent=0
    #allocation5 [shape = 'u8[8192]{0}', space=vmem, size = 0x2000, scoped, tag = 'output window, operand 0']
    #allocation6 [shape = 's32[2]{0}', space=sflag, size = 0x8, scoped, tag = 'scoped memory for head_forward.3']
    %8 = vsyncpa [#allocation6], 0
    %s9 = scalar_lea.sflag [#allocation6], 1
    %10 = vsyncpa %s9, 0
    loop: start=0, step=1, limit=4
    $region2: #{head_forward.3} parent=1 // loop_pre_header
      _
    $region3: #{head_forward.3} parent=1 // loop_header
      %s12 = sphi 0, %s16
      %p13 = scmp.ge.s32.totalorder %s12, 4
      %s19 = sphi 0, %s38
      %s20 = sphi 0, %s34
      %s21 = sphi 0, %s30
      %s22 = sphi 0, %s19
      %s23 = sphi 0, %s20
      %s24 = sphi 0, %s21
      %s25 = sphi 0, %s22
      %s26 = sphi 0, %s23
      %s27 = sphi 0, %s24
      %s43 = sphi 0, %s45
      %s46 = sphi 0, %s43
      %s47 = sphi 0, %s46
      %s63 = sphi 0, %s47
      %s75 = sphi 0, %s77
      %s78 = sphi 0, %s75
      %s79 = sphi 0, %s78
      %s95 = sphi 0, %s79
      %s107 = sphi 0, %s109
      %s110 = sphi 0, %s107
      %s111 = sphi 0, %s110
      %s127 = sphi 0, %s111
      %s135 = sphi 0, %s137
      %s138 = sphi 0, %s135
      %s139 = sphi 0, %s138
      %s155 = sphi 0, %s139
    $region4: #{head_forward.3} parent=1 // loop_header_branch
      %15 = sbr.rel (%p13) target = $region8
    $region5: #{head_forward.3} parent=1 // loop_body
      %s17 = ssub.s32 %s12, 1
      %s18 = ssub.s32 %s12, 2
      %s28 = sadd.s32 1, %s21
      %p29 = scmp.ge.s32.totalorder %s28, 1
      %s30 = scalar_select %p29, 0, %s28
      %s31 = sadd.s32 1, %s20
      %s32 = scalar_select %p29, %s31, %s20
      %p33 = scmp.ge.s32.totalorder %s32, 1
      %s34 = scalar_select %p33, 0, %s32
      %s35 = sadd.s32 1, %s19
      %s36 = scalar_select %p33, %s35, %s19
      %p37 = scmp.ge.s32.totalorder %s36, 2
      %s38 = scalar_select %p37, 0, %s36
      %s39 = ssub.s32 %s19, %s38
      %s40 = ssub.s32 %s20, %s34
      %s41 = sor.u32 %s39, %s40
      %p42 = scmp.eq.s32.totalorder %s41, 0
      %s44 = sadd.s32 %s43, 1
      %s45 = scalar_select %p42, %s43, %s44
      %p48 = pneg %p42
      %p49 = scmp.eq.s32.totalorder %s12, 1
      %p50 = por %p48, %p49
      %p51 = scmp.ne.s32.totalorder %s43, %s46
      %p52 = scmp.eq.s32.totalorder %s12, 0
      %p53 = por %p51, %p52
      %p54 = scmp.ne.s32.totalorder %s43, %s46
      %p55 = scmp.eq.s32.totalorder %s17, 1
      %p56 = por %p54, %p55
      %p57 = scmp.ne.s32.totalorder %s46, %s47
      %p58 = scmp.eq.s32.totalorder %s17, 0
      %p59 = por %p57, %p58
      %p60 = scmp.ne.s32.totalorder %s46, %s47
      %p61 = scmp.eq.s32.totalorder %s18, 1
      %p62 = por %p60, %p61
      %p64 = scmp.ne.s32.totalorder %s47, %s63
      %p65 = scmp.eq.s32.totalorder %s18, 0
      %p66 = por %p64, %p65
      %p67 = scmp.lt.s32.totalorder %s21, %s20
      %s68 = scalar_select %p67, %s21, %s20
      %p69 = scmp.lt.s32.totalorder %s30, %s34
      %s70 = scalar_select %p69, %s30, %s34
      %s71 = ssub.s32 %s19, %s38
      %s72 = ssub.s32 %s68, %s70
      %s73 = sor.u32 %s71, %s72
      %p74 = scmp.eq.s32.totalorder %s73, 0
      %s76 = sadd.s32 %s75, 1
      %s77 = scalar_select %p74, %s75, %s76
      %p80 = pneg %p74
      %p81 = scmp.eq.s32.totalorder %s12, 1
      %p82 = por %p80, %p81
      %p83 = scmp.ne.s32.totalorder %s75, %s78
      %p84 = scmp.eq.s32.totalorder %s12, 0
      %p85 = por %p83, %p84
      %p86 = scmp.ne.s32.totalorder %s75, %s78
      %p87 = scmp.eq.s32.totalorder %s17, 1
      %p88 = por %p86, %p87
      %p89 = scmp.ne.s32.totalorder %s78, %s79
      %p90 = scmp.eq.s32.totalorder %s17, 0
      %p91 = por %p89, %p90
      %p92 = scmp.ne.s32.totalorder %s78, %s79
      %p93 = scmp.eq.s32.totalorder %s18, 1
      %p94 = por %p92, %p93
      %p96 = scmp.ne.s32.totalorder %s79, %s95
      %p97 = scmp.eq.s32.totalorder %s18, 0
      %p98 = por %p96, %p97
      %p99 = scmp.lt.s32.totalorder %s21, %s20
      %s100 = scalar_select %p99, %s21, %s20
      %p101 = scmp.lt.s32.totalorder %s30, %s34
      %s102 = scalar_select %p101, %s30, %s34
      %s103 = ssub.s32 %s19, %s38
      %s104 = ssub.s32 %s100, %s102
      %s105 = sor.u32 %s103, %s104
      %p106 = scmp.eq.s32.totalorder %s105, 0
      %s108 = sadd.s32 %s107, 1
      %s109 = scalar_select %p106, %s107, %s108
      %p112 = pneg %p106
      %p113 = scmp.eq.s32.totalorder %s12, 1
      %p114 = por %p112, %p113
      %p115 = scmp.ne.s32.totalorder %s107, %s110
      %p116 = scmp.eq.s32.totalorder %s12, 0
      %p117 = por %p115, %p116
      %p118 = scmp.ne.s32.totalorder %s107, %s110
      %p119 = scmp.eq.s32.totalorder %s17, 1
      %p120 = por %p118, %p119
      %p121 = scmp.ne.s32.totalorder %s110, %s111
      %p122 = scmp.eq.s32.totalorder %s17, 0
      %p123 = por %p121, %p122
      %p124 = scmp.ne.s32.totalorder %s110, %s111
      %p125 = scmp.eq.s32.totalorder %s18, 1
      %p126 = por %p124, %p125
      %p128 = scmp.ne.s32.totalorder %s111, %s127
      %p129 = scmp.eq.s32.totalorder %s18, 0
      %p130 = por %p128, %p129
      %s131 = ssub.s32 %s19, %s38
      %s132 = ssub.s32 %s20, %s34
      %s133 = sor.u32 %s131, %s132
      %p134 = scmp.eq.s32.totalorder %s133, 0
      %s136 = sadd.s32 %s135, 1
      %s137 = scalar_select %p134, %s135, %s136
      %p140 = pneg %p134
      %p141 = scmp.eq.s32.totalorder %s12, 1
      %p142 = por %p140, %p141
      %p143 = scmp.ne.s32.totalorder %s135, %s138
      %p144 = scmp.eq.s32.totalorder %s12, 0
      %p145 = por %p143, %p144
      %p146 = scmp.ne.s32.totalorder %s135, %s138
      %p147 = scmp.eq.s32.totalorder %s17, 1
      %p148 = por %p146, %p147
      %p149 = scmp.ne.s32.totalorder %s138, %s139
      %p150 = scmp.eq.s32.totalorder %s17, 0
      %p151 = por %p149, %p150
      %p152 = scmp.ne.s32.totalorder %s138, %s139
      %p153 = scmp.eq.s32.totalorder %s18, 1
      %p154 = por %p152, %p153
      %p156 = scmp.ne.s32.totalorder %s139, %s155
      %p157 = scmp.eq.s32.totalorder %s18, 0
      %p158 = por %p156, %p157
      %p159 = scmp.le.s32.totalorder 1, %s12
      %p160 = scmp.lt.s32.totalorder %s12, 3
      %p161 = pnand %p159, %p160
      %p162 = pneg %p161
      // Predicated region
      $region9: #{head_forward.3} parent=5 // pred_check
        _
      $region10: #{head_forward.3} parent=5 // pred_check_branch
        %164 = sbr.rel (%p161) target = $region12
      $region11: #{head_forward.3} parent=5 // pred_region
        %s165 = ssub.s32 %s12, 1
      $region12: #{head_forward.3} parent=5 // pred_fallthru
        _
      %p166 = scmp.lt.s32.totalorder %s12, 2
      // Predicated region
      $region13: #{head_forward.3} parent=5 // pred_check
        %p167 = pneg %p166
      $region14: #{head_forward.3} parent=5 // pred_check_branch
        %169 = sbr.rel (%p167) target = $region16
      $region15: #{head_forward.3} parent=5 // pred_region
        // Predicated region
        $region17: #{head_forward.3} parent=15 // pred_check
          %p170 = pneg %p53
        $region18: #{head_forward.3} parent=15 // pred_check_branch
          %172 = sbr.rel (%p170) target = $region20
        $region19: #{head_forward.3} parent=15 // pred_region
          %p173 = scmp.lt.s32.totalorder %s19, 1
          %s174 = scalar_select %p173, %s19, 1
          %p175 = scmp.lt.s32.totalorder %s20, 0
          %s176 = scalar_select %p175, %s20, 0
          %s177 = sadd.s32 %s176, %s174
          %s178 = smul.addr %s177, 8
          %s179 = scalar_lea.vmem %s0, %s178
        $region20: #{head_forward.3} parent=15 // pred_fallthru
          _
        // Predicated region
        $region21: #{head_forward.3} parent=15 // pred_check
          %p180 = pneg %p85
        $region22: #{head_forward.3} parent=15 // pred_check_branch
          %182 = sbr.rel (%p180) target = $region24
        $region23: #{head_forward.3} parent=15 // pred_region
          %p183 = scmp.lt.s32.totalorder %s21, %s20
          %s184 = scalar_select %p183, %s21, %s20
          %p185 = scmp.lt.s32.totalorder %s19, 1
          %s186 = scalar_select %p185, %s19, 1
          %p187 = scmp.lt.s32.totalorder %s184, 0
          %s188 = scalar_select %p187, %s184, 0
          %s189 = sadd.s32 %s188, %s186
          %s190 = smul.addr %s189, 8
          %s191 = scalar_lea.vmem %s1, %s190
          %p192 = scmp.lt.s32.totalorder %s21, %s20
          %s193 = scalar_select %p192, %s21, %s20
        $region24: #{head_forward.3} parent=15 // pred_fallthru
          _
        // Predicated region
        $region25: #{head_forward.3} parent=15 // pred_check
          %p194 = pneg %p117
        $region26: #{head_forward.3} parent=15 // pred_check_branch
          %196 = sbr.rel (%p194) target = $region28
        $region27: #{head_forward.3} parent=15 // pred_region
          %p197 = scmp.lt.s32.totalorder %s21, %s20
          %s198 = scalar_select %p197, %s21, %s20
          %p199 = scmp.lt.s32.totalorder %s19, 1
          %s200 = scalar_select %p199, %s19, 1
          %p201 = scmp.lt.s32.totalorder %s198, 0
          %s202 = scalar_select %p201, %s198, 0
          %s203 = sadd.s32 %s202, %s200
          %s204 = smul.addr %s203, 8
          %s205 = scalar_lea.vmem %s2, %s204
          %p206 = scmp.lt.s32.totalorder %s21, %s20
          %s207 = scalar_select %p206, %s21, %s20
        $region28: #{head_forward.3} parent=15 // pred_fallthru
          _
      $region16: #{head_forward.3} parent=5 // pred_fallthru
        _
      %p208 = scmp.le.s32.totalorder 1, %s12
      %p209 = scmp.lt.s32.totalorder %s12, 3
      %p210 = pnand %p208, %p209
      %p211 = pneg %p210
      // Predicated region
      $region29: #{head_forward.3} parent=5 // pred_check
        _
      $region30: #{head_forward.3} parent=5 // pred_check_branch
        %213 = sbr.rel (%p210) target = $region32
      $region31: #{head_forward.3} parent=5 // pred_region
        %s214 = ssub.s32 %s12, 1
        %p215 = scmp.lt.s32.totalorder %s22, 1
        %s216 = scalar_select %p215, %s22, 1
        %p217 = scmp.lt.s32.totalorder %s23, 0
        %s218 = scalar_select %p217, %s23, 0
        %s219 = sadd.s32 %s218, %s216
        %s220 = smul.addr %s219, 8
        %s221 = scalar_lea.vmem %s0, %s220
        %p222 = pneg %p59
        %p223 = pneg %p56
        %p224 = scmp.lt.s32.totalorder %s24, %s23
        %s225 = scalar_select %p224, %s24, %s23
        %p226 = scmp.lt.s32.totalorder %s22, 1
        %s227 = scalar_select %p226, %s22, 1
        %p228 = scmp.lt.s32.totalorder %s225, 0
        %s229 = scalar_select %p228, %s225, 0
        %s230 = sadd.s32 %s229, %s227
        %s231 = smul.addr %s230, 8
        %s232 = scalar_lea.vmem %s1, %s231
        %p233 = pneg %p91
        %p234 = pneg %p88
        %p235 = scmp.lt.s32.totalorder %s24, %s23
        %s236 = scalar_select %p235, %s24, %s23
        %p237 = scmp.lt.s32.totalorder %s22, 1
        %s238 = scalar_select %p237, %s22, 1
        %p239 = scmp.lt.s32.totalorder %s236, 0
        %s240 = scalar_select %p239, %s236, 0
        %s241 = sadd.s32 %s240, %s238
        %s242 = smul.addr %s241, 8
        %s243 = scalar_lea.vmem %s2, %s242
        %p244 = pneg %p123
        %p245 = pneg %p120
        %p246 = pneg %p151
        %p247 = pneg %p148
        %s248 = sand.u32 %s138, 1
        %s249 = scalar_lea.sflag [#allocation6], %s248
        %s250 = sand.u32 %s138, 1
        %s251 = smul.addr %s250, 8
        %s252 = scalar_lea.vmem [#allocation5], %s251
        %p253 = scmp.lt.s32.totalorder %s22, 1
        %s254 = scalar_select %p253, %s22, 1
        %p255 = scmp.lt.s32.totalorder %s23, 0
        %s256 = scalar_select %p255, %s23, 0
        %s257 = sadd.s32 %s256, %s254
        %s258 = smul.addr %s257, 8
        %s259 = scalar_lea.vmem %s0, %s258
        %p260 = scmp.lt.s32.totalorder %s24, %s23
        %s261 = scalar_select %p260, %s24, %s23
        %p262 = scmp.lt.s32.totalorder %s22, 1
        %s263 = scalar_select %p262, %s22, 1
        %p264 = scmp.lt.s32.totalorder %s261, 0
        %s265 = scalar_select %p264, %s261, 0
        %s266 = sadd.s32 %s265, %s263
        %s267 = smul.addr %s266, 8
        %s268 = scalar_lea.vmem %s1, %s267
        %p269 = scmp.lt.s32.totalorder %s24, %s23
        %s270 = scalar_select %p269, %s24, %s23
        %p271 = scmp.lt.s32.totalorder %s24, %s23
        %s272 = scalar_select %p271, %s24, %s23
        %p273 = scmp.lt.s32.totalorder %s22, 1
        %s274 = scalar_select %p273, %s22, 1
        %p275 = scmp.lt.s32.totalorder %s272, 0
        %s276 = scalar_select %p275, %s272, 0
        %s277 = sadd.s32 %s276, %s274
        %s278 = smul.addr %s277, 8
        %s279 = scalar_lea.vmem %s2, %s278
        %p280 = scmp.lt.s32.totalorder %s24, %s23
        %s281 = scalar_select %p280, %s24, %s23
        %p282 = scmp.eq.s32.totalorder %s24, 0
        // Predicated region
        $region33: #{head_forward.3} parent=31 // pred_check
          %p283 = pneg %p282
        $region34: #{head_forward.3} parent=31 // pred_check_branch
          %285 = sbr.rel (%p283) target = $region36
        $region35: #{head_forward.3} parent=31 // pred_region
          %vm286 = vcmask 7168
          %287 = vst.msk [vmem:[#allocation3] sm:$0xff] %vm286, -1e+30
          %288 = vst.msk [vmem:[#allocation4] sm:$0xff] %vm286, 0.0
          %vm289 = vcmask 130048
          %290 = vst.msk [vmem:[#allocation2] sm:$0xff] %vm289, 0.0
        $region36: #{head_forward.3} parent=31 // pred_fallthru
          _
        %p291 = scmp.lt.s32.totalorder %s24, %s23
        // Predicated region
        $region37: #{head_forward.3} parent=31 // pred_check
          %p292 = pneg %p291
        $region38: #{head_forward.3} parent=31 // pred_check_branch
          %294 = sbr.rel (%p292) target = $region40
        $region39: #{head_forward.3} parent=31 // pred_region
          %v295 = vld [vmem:[%s259] sm:$0xff]
          %v296 = vld [vmem:[%s268] sm:$0xff]
          %vm297 = vcmask 130048
          %v299 = vsel %vm297, %v295, 0
          %v302 = vsel %vm297, %v296, 0
          %304 = vmatprep.subr.mxu0 0.0
          %305 = vmatpush1.xpose.msra.mxu0 %v302
          %306 = vmatprep.subr.mxu0 0.0
          %307 = vmatpush1.xpose.msra.mxu0 0.0
          %308 = vmatprep.subr.mxu0 0.0
          %309 = vmatpush1.xpose.msra.mxu0 0.0
          %310 = vmatprep.subr.mxu0 0.0
          %311 = vmatpush1.xpose.msra.mxu0 0.0
          %312 = vmatprep.subr.mxu0 0.0
          %313 = vmatpush1.xpose.msra.mxu0 0.0
          %314 = vmatprep.subr.mxu0 0.0
          %315 = vmatpush1.xpose.msra.mxu0 0.0
          %316 = vmatprep.subr.mxu0 0.0
          %317 = vmatpush1.xpose.msra.mxu0 0.0
          %318 = vmatprep.subr.mxu0 0.0
          %319 = vmatpush1.xpose.msra.mxu0 0.0
          %320 = vmatprep.subr.mxu0 0.0
          %321 = vmatpush1.xpose.msra.mxu0 0.0
          %322 = vmatprep.subr.mxu0 0.0
          %323 = vmatpush1.xpose.msra.mxu0 0.0
          %324 = vmatprep.subr.mxu0 0.0
          %325 = vmatpush1.xpose.msra.mxu0 0.0
          %326 = vmatprep.subr.mxu0 0.0
          %327 = vmatpush1.xpose.msra.mxu0 0.0
          %328 = vmatprep.subr.mxu0 0.0
          %329 = vmatpush1.xpose.msra.mxu0 0.0
          %330 = vmatprep.subr.mxu0 0.0
          %331 = vmatpush1.xpose.msra.mxu0 0.0
          %332 = vmatprep.subr.mxu0 0.0
          %333 = vmatpush1.xpose.msra.mxu0 0.0
          %334 = vmatprep.subr.mxu0 0.0
          %335 = vmatpush1.xpose.msra.mxu0 0.0
          %336 = vmatprep.subr.mxu0 0.0
          %337 = vmatpush1.xpose.msra.mxu0 0.0
          %338 = vmatprep.subr.mxu0 0.0
          %339 = vmatpush1.xpose.msra.mxu0 0.0
          %340 = vmatprep.subr.mxu0 0.0
          %341 = vmatpush1.xpose.msra.mxu0 0.0
          %342 = vmatprep.subr.mxu0 0.0
          %343 = vmatpush1.xpose.msra.mxu0 0.0
          %344 = vmatprep.subr.mxu0 0.0
          %345 = vmatpush1.xpose.msra.mxu0 0.0
          %346 = vmatprep.subr.mxu0 0.0
          %347 = vmatpush1.xpose.msra.mxu0 0.0
          %348 = vmatprep.subr.mxu0 0.0
          %349 = vmatpush1.xpose.msra.mxu0 0.0
          %350 = vmatprep.subr.mxu0 0.0
          %351 = vmatpush1.xpose.msra.mxu0 0.0
          %352 = vmatprep.subr.mxu0 0.0
          %353 = vmatpush1.xpose.msra.mxu0 0.0
          %354 = vmatprep.subr.mxu0 0.0
          %355 = vmatpush1.xpose.msra.mxu0 0.0
          %356 = vmatprep.subr.mxu0 0.0
          %357 = vmatpush1.xpose.msra.mxu0 0.0
          %358 = vmatprep.subr.mxu0 0.0
          %359 = vmatpush1.xpose.msra.mxu0 0.0
          %360 = vmatprep.subr.mxu0 0.0
          %361 = vmatpush1.xpose.msra.mxu0 0.0
          %362 = vmatprep.subr.mxu0 0.0
          %363 = vmatpush1.xpose.msra.mxu0 0.0
          %364 = vmatprep.subr.mxu0 0.0
          %365 = vmatpush1.xpose.msra.mxu0 0.0
          %366 = vmatprep.subr.mxu0 0.0
          %367 = vmatpush1.xpose.msra.mxu0 0.0
          %368 = vmatprep.mubr.f32.mxu0 0.0
          %369 = vmatmul.mubr.f32.gmra.mrb[0].mxu0 %v299
          %v370 = vpop.f32.mrb[0].mxu0
          %v371 = vadd.f32 0.0, %v370
          %v372 = vpop.f32.mrb[0].mxu0
          %373 = vdwg.mxu0
          %v374 = vld [vmem:[#allocation3] sm:$0xff]
          %vm375 = vcmask 64512
          %v376 = vsel %vm375, %v371, -inf
          %377 = vmax.xlane.f32.xlu0 %v376
          %v378 = vpop.xlane.xlu0 %377
          %v379 = vmax.f32 %v374, %v378
          %v380 = vsub.f32 %v374, %v379
          %v381 = vmul.f32 %v380, 1.442695
          %v382 = vpow.pop %v381
          %384 = vset.pattern.permute.xlu0 0
          %385 = vperm.xlu0 %384, %v379
          %v386 = vpop.permute.xlu0 %385
          %v388 = vsub.f32 %v371, %v386
          %v389 = vmul.f32 %v388, 1.442695
          %v390 = vpow.pop %v389
          %v391 = vld [vmem:[#allocation4] sm:$0xff]
          %v392 = vmul.f32 %v382, %v391
          %v393 = vsel %vm375, %v390, 0.0
          %394 = vadd.xlane.f32.xlu0 %v393
          %v395 = vpop.xlane.xlu0 %394
          %v396 = vadd.f32 %v392, %v395
          %vm397 = vcmask 7168
          %398 = vst.msk [vmem:[#allocation4] sm:$0xff] %vm397, %v396
          %v399 = vld [vmem:[#allocation2] sm:$0xff]
          %401 = vset.pattern.permute.xlu0 0
          %402 = vperm.xlu0 %401, %v382
          %v403 = vpop.permute.xlu0 %402
          %v405 = vmul.f32 %v403, %v399
          %v406 = vld [vmem:[%s279] sm:$0xff]
          %v408 = vsel %vm375, %v390, 0
          %410 = vmatprep.subr.mxu0 0.0
          %411 = vmatpush1.msra.mxu0 %v406
          %412 = vmatprep.subr.mxu0 0.0
          %413 = vmatpush1.msra.mxu0 0.0
          %414 = vmatprep.subr.mxu0 0.0
          %415 = vmatpush1.msra.mxu0 0.0
          %416 = vmatprep.subr.mxu0 0.0
          %417 = vmatpush1.msra.mxu0 0.0
          %418 = vmatprep.subr.mxu0 0.0
          %419 = vmatpush1.msra.mxu0 0.0
          %420 = vmatprep.subr.mxu0 0.0
          %421 = vmatpush1.msra.mxu0 0.0
          %422 = vmatprep.subr.mxu0 0.0
          %423 = vmatpush1.msra.mxu0 0.0
          %424 = vmatprep.subr.mxu0 0.0
          %425 = vmatpush1.msra.mxu0 0.0
          %426 = vmatprep.subr.mxu0 0.0
          %427 = vmatpush1.msra.mxu0 0.0
          %428 = vmatprep.subr.mxu0 0.0
          %429 = vmatpush1.msra.mxu0 0.0
          %430 = vmatprep.subr.mxu0 0.0
          %431 = vmatpush1.msra.mxu0 0.0
          %432 = vmatprep.subr.mxu0 0.0
          %433 = vmatpush1.msra.mxu0 0.0
          %434 = vmatprep.subr.mxu0 0.0
          %435 = vmatpush1.msra.mxu0 0.0
          %436 = vmatprep.subr.mxu0 0.0
          %437 = vmatpush1.msra.mxu0 0.0
          %438 = vmatprep.subr.mxu0 0.0
          %439 = vmatpush1.msra.mxu0 0.0
          %440 = vmatprep.subr.mxu0 0.0
          %441 = vmatpush1.msra.mxu0 0.0
          %442 = vmatprep.subr.mxu0 0.0
          %443 = vmatpush1.msra.mxu0 0.0
          %444 = vmatprep.subr.mxu0 0.0
          %445 = vmatpush1.msra.mxu0 0.0
          %446 = vmatprep.subr.mxu0 0.0
          %447 = vmatpush1.msra.mxu0 0.0
          %448 = vmatprep.subr.mxu0 0.0
          %449 = vmatpush1.msra.mxu0 0.0
          %450 = vmatprep.subr.mxu0 0.0
          %451 = vmatpush1.msra.mxu0 0.0
          %452 = vmatprep.subr.mxu0 0.0
          %453 = vmatpush1.msra.mxu0 0.0
          %454 = vmatprep.subr.mxu0 0.0
          %455 = vmatpush1.msra.mxu0 0.0
          %456 = vmatprep.subr.mxu0 0.0
          %457 = vmatpush1.msra.mxu0 0.0
          %458 = vmatprep.subr.mxu0 0.0
          %459 = vmatpush1.msra.mxu0 0.0
          %460 = vmatprep.subr.mxu0 0.0
          %461 = vmatpush1.msra.mxu0 0.0
          %462 = vmatprep.subr.mxu0 0.0
          %463 = vmatpush1.msra.mxu0 0.0
          %464 = vmatprep.subr.mxu0 0.0
          %465 = vmatpush1.msra.mxu0 0.0
          %466 = vmatprep.subr.mxu0 0.0
          %467 = vmatpush1.msra.mxu0 0.0
          %468 = vmatprep.subr.mxu0 0.0
          %469 = vmatpush1.msra.mxu0 0.0
          %470 = vmatprep.subr.mxu0 0.0
          %471 = vmatpush1.msra.mxu0 0.0
          %472 = vmatprep.subr.mxu0 0.0
          %473 = vmatpush1.msra.mxu0 0.0
          %474 = vmatprep.mubr.f32.mxu0 0.0
          %475 = vmatmul.mubr.f32.gmra.mrb[0].mxu0 %v408
          %v476 = vpop.f32.mrb[0].mxu0
          %v477 = vadd.f32 0.0, %v476
          %v478 = vpop.f32.mrb[0].mxu0
          %479 = vdwg.mxu0
          %v480 = vadd.f32 %v405, %v477
          %481 = vst.msk [vmem:[#allocation2] sm:$0xff] %vm297, %v480
          %482 = vst.msk [vmem:[#allocation3] sm:$0xff] %vm397, %v379
        $region40: #{head_forward.3} parent=31 // pred_fallthru
          _
        %p483 = scmp.eq.s32.totalorder %s24, %s23
        // Predicated region
        $region41: #{head_forward.3} parent=31 // pred_check
          %p484 = pneg %p483
        $region42: #{head_forward.3} parent=31 // pred_check_branch
          %486 = sbr.rel (%p484) target = $region44
        $region43: #{head_forward.3} parent=31 // pred_region
          %v487 = vlaneseq
          %v488 = vshrl.u32 %v487, 7
          %v489 = vlaneseq
          %v490 = vand.u32 %v489, 127
          %vm491 = vcmp.le.s32.totalorder %v490, %v488
          %v492 = vld [vmem:[%s259] sm:$0xff]
          %v493 = vld [vmem:[%s268] sm:$0xff]
          %vm494 = vcmask 130048
          %v496 = vsel %vm494, %v492, 0
          %v499 = vsel %vm494, %v493, 0
          %501 = vmatprep.subr.mxu0 0.0
          %502 = vmatpush1.xpose.msra.mxu0 %v499
          %503 = vmatprep.subr.mxu0 0.0
          %504 = vmatpush1.xpose.msra.mxu0 0.0
          %505 = vmatprep.subr.mxu0 0.0
          %506 = vmatpush1.xpose.msra.mxu0 0.0
          %507 = vmatprep.subr.mxu0 0.0
          %508 = vmatpush1.xpose.msra.mxu0 0.0
          %509 = vmatprep.subr.mxu0 0.0
          %510 = vmatpush1.xpose.msra.mxu0 0.0
          %511 = vmatprep.subr.mxu0 0.0
          %512 = vmatpush1.xpose.msra.mxu0 0.0
          %513 = vmatprep.subr.mxu0 0.0
          %514 = vmatpush1.xpose.msra.mxu0 0.0
          %515 = vmatprep.subr.mxu0 0.0
          %516 = vmatpush1.xpose.msra.mxu0 0.0
          %517 = vmatprep.subr.mxu0 0.0
          %518 = vmatpush1.xpose.msra.mxu0 0.0
          %519 = vmatprep.subr.mxu0 0.0
          %520 = vmatpush1.xpose.msra.mxu0 0.0
          %521 = vmatprep.subr.mxu0 0.0
          %522 = vmatpush1.xpose.msra.mxu0 0.0
          %523 = vmatprep.subr.mxu0 0.0
          %524 = vmatpush1.xpose.msra.mxu0 0.0
          %525 = vmatprep.subr.mxu0 0.0
          %526 = vmatpush1.xpose.msra.mxu0 0.0
          %527 = vmatprep.subr.mxu0 0.0
          %528 = vmatpush1.xpose.msra.mxu0 0.0
          %529 = vmatprep.subr.mxu0 0.0
          %530 = vmatpush1.xpose.msra.mxu0 0.0
          %531 = vmatprep.subr.mxu0 0.0
          %532 = vmatpush1.xpose.msra.mxu0 0.0
          %533 = vmatprep.subr.mxu0 0.0
          %534 = vmatpush1.xpose.msra.mxu0 0.0
          %535 = vmatprep.subr.mxu0 0.0
          %536 = vmatpush1.xpose.msra.mxu0 0.0
          %537 = vmatprep.subr.mxu0 0.0
          %538 = vmatpush1.xpose.msra.mxu0 0.0
          %539 = vmatprep.subr.mxu0 0.0
          %540 = vmatpush1.xpose.msra.mxu0 0.0
          %541 = vmatprep.subr.mxu0 0.0
          %542 = vmatpush1.xpose.msra.mxu0 0.0
          %543 = vmatprep.subr.mxu0 0.0
          %544 = vmatpush1.xpose.msra.mxu0 0.0
          %545 = vmatprep.subr.mxu0 0.0
          %546 = vmatpush1.xpose.msra.mxu0 0.0
          %547 = vmatprep.subr.mxu0 0.0
          %548 = vmatpush1.xpose.msra.mxu0 0.0
          %549 = vmatprep.subr.mxu0 0.0
          %550 = vmatpush1.xpose.msra.mxu0 0.0
          %551 = vmatprep.subr.mxu0 0.0
          %552 = vmatpush1.xpose.msra.mxu0 0.0
          %553 = vmatprep.subr.mxu0 0.0
          %554 = vmatpush1.xpose.msra.mxu0 0.0
          %555 = vmatprep.subr.mxu0 0.0
          %556 = vmatpush1.xpose.msra.mxu0 0.0
          %557 = vmatprep.subr.mxu0 0.0
          %558 = vmatpush1.xpose.msra.mxu0 0.0
          %559 = vmatprep.subr.mxu0 0.0
          %560 = vmatpush1.xpose.msra.mxu0 0.0
          %561 = vmatprep.subr.mxu0 0.0
          %562 = vmatpush1.xpose.msra.mxu0 0.0
          %563 = vmatprep.subr.mxu0 0.0
          %564 = vmatpush1.xpose.msra.mxu0 0.0
          %565 = vmatprep.mubr.f32.mxu0 0.0
          %566 = vmatmul.mubr.f32.gmra.mrb[0].mxu0 %v496
          %v567 = vpop.f32.mrb[0].mxu0
          %v568 = vadd.f32 0.0, %v567
          %v569 = vpop.f32.mrb[0].mxu0
          %570 = vdwg.mxu0
          %v571 = vsel %vm491, %v568, -1e+30
          %v572 = vld [vmem:[#allocation3] sm:$0xff]
          %vm573 = vcmask 64512
          %v574 = vsel %vm573, %v571, -inf
          %575 = vmax.xlane.f32.xlu0 %v574
          %v576 = vpop.xlane.xlu0 %575
          %v577 = vmax.f32 %v572, %v576
          %v578 = vsub.f32 %v572, %v577
          %v579 = vmul.f32 %v578, 1.442695
          %v580 = vpow.pop %v579
          %582 = vset.pattern.permute.xlu0 0
          %583 = vperm.xlu0 %582, %v577
          %v584 = vpop.permute.xlu0 %583
          %v586 = vsub.f32 %v571, %v584
          %v587 = vmul.f32 %v586, 1.442695
          %v588 = vpow.pop %v587
          %v589 = vld [vmem:[#allocation4] sm:$0xff]
          %v590 = vmul.f32 %v580, %v589
          %v591 = vsel %vm573, %v588, 0.0
          %592 = vadd.xlane.f32.xlu0 %v591
          %v593 = vpop.xlane.xlu0 %592
          %v594 = vadd.f32 %v590, %v593
          %vm595 = vcmask 7168
          %596 = vst.msk [vmem:[#allocation4] sm:$0xff] %vm595, %v594
          %v597 = vld [vmem:[#allocation2] sm:$0xff]
          %599 = vset.pattern.permute.xlu0 0
          %600 = vperm.xlu0 %599, %v580
          %v601 = vpop.permute.xlu0 %600
          %v603 = vmul.f32 %v601, %v597
          %v604 = vld [vmem:[%s279] sm:$0xff]
          %v606 = vsel %vm573, %v588, 0
          %608 = vmatprep.subr.mxu0 0.0
          %609 = vmatpush1.msra.mxu0 %v604
          %610 = vmatprep.subr.mxu0 0.0
          %611 = vmatpush1.msra.mxu0 0.0
          %612 = vmatprep.subr.mxu0 0.0
          %613 = vmatpush1.msra.mxu0 0.0
          %614 = vmatprep.subr.mxu0 0.0
          %615 = vmatpush1.msra.mxu0 0.0
          %616 = vmatprep.subr.mxu0 0.0
          %617 = vmatpush1.msra.mxu0 0.0
          %618 = vmatprep.subr.mxu0 0.0
          %619 = vmatpush1.msra.mxu0 0.0
          %620 = vmatprep.subr.mxu0 0.0
          %621 = vmatpush1.msra.mxu0 0.0
          %622 = vmatprep.subr.mxu0 0.0
          %623 = vmatpush1.msra.mxu0 0.0
          %624 = vmatprep.subr.mxu0 0.0
          %625 = vmatpush1.msra.mxu0 0.0
          %626 = vmatprep.subr.mxu0 0.0
          %627 = vmatpush1.msra.mxu0 0.0
          %628 = vmatprep.subr.mxu0 0.0
          %629 = vmatpush1.msra.mxu0 0.0
          %630 = vmatprep.subr.mxu0 0.0
          %631 = vmatpush1.msra.mxu0 0.0
          %632 = vmatprep.subr.mxu0 0.0
          %633 = vmatpush1.msra.mxu0 0.0
          %634 = vmatprep.subr.mxu0 0.0
          %635 = vmatpush1.msra.mxu0 0.0
          %636 = vmatprep.subr.mxu0 0.0
          %637 = vmatpush1.msra.mxu0 0.0
          %638 = vmatprep.subr.mxu0 0.0
          %639 = vmatpush1.msra.mxu0 0.0
          %640 = vmatprep.subr.mxu0 0.0
          %641 = vmatpush1.msra.mxu0 0.0
          %642 = vmatprep.subr.mxu0 0.0
          %643 = vmatpush1.msra.mxu0 0.0
          %644 = vmatprep.subr.mxu0 0.0
          %645 = vmatpush1.msra.mxu0 0.0
          %646 = vmatprep.subr.mxu0 0.0
          %647 = vmatpush1.msra.mxu0 0.0
          %648 = vmatprep.subr.mxu0 0.0
          %649 = vmatpush1.msra.mxu0 0.0
          %650 = vmatprep.subr.mxu0 0.0
          %651 = vmatpush1.msra.mxu0 0.0
          %652 = vmatprep.subr.mxu0 0.0
          %653 = vmatpush1.msra.mxu0 0.0
          %654 = vmatprep.subr.mxu0 0.0
          %655 = vmatpush1.msra.mxu0 0.0
          %656 = vmatprep.subr.mxu0 0.0
          %657 = vmatpush1.msra.mxu0 0.0
          %658 = vmatprep.subr.mxu0 0.0
          %659 = vmatpush1.msra.mxu0 0.0
          %660 = vmatprep.subr.mxu0 0.0
          %661 = vmatpush1.msra.mxu0 0.0
          %662 = vmatprep.subr.mxu0 0.0
          %663 = vmatpush1.msra.mxu0 0.0
          %664 = vmatprep.subr.mxu0 0.0
          %665 = vmatpush1.msra.mxu0 0.0
          %666 = vmatprep.subr.mxu0 0.0
          %667 = vmatpush1.msra.mxu0 0.0
          %668 = vmatprep.subr.mxu0 0.0
          %669 = vmatpush1.msra.mxu0 0.0
          %670 = vmatprep.subr.mxu0 0.0
          %671 = vmatpush1.msra.mxu0 0.0
          %672 = vmatprep.mubr.f32.mxu0 0.0
          %673 = vmatmul.mubr.f32.gmra.mrb[0].mxu0 %v606
          %v674 = vpop.f32.mrb[0].mxu0
          %v675 = vadd.f32 0.0, %v674
          %v676 = vpop.f32.mrb[0].mxu0
          %677 = vdwg.mxu0
          %v678 = vadd.f32 %v603, %v675
          %679 = vst.msk [vmem:[#allocation2] sm:$0xff] %vm494, %v678
          %680 = vst.msk [vmem:[#allocation3] sm:$0xff] %vm595, %v577
        $region44: #{head_forward.3} parent=31 // pred_fallthru
          _
        // Predicated region
        $region45: #{head_forward.3} parent=31 // pred_check
          %p681 = pneg %p282
        $region46: #{head_forward.3} parent=31 // pred_check_branch
          %683 = sbr.rel (%p681) target = $region48
        $region47: #{head_forward.3} parent=31 // pred_region
          %v684 = vld [vmem:[#allocation4] sm:$0xff]
          %v685 = vrcp.pop %v684
          %v686 = vld [vmem:[#allocation2] sm:$0xff]
          %688 = vset.pattern.permute.xlu0 0
          %689 = vperm.xlu0 %688, %v685
          %v690 = vpop.permute.xlu0 %689
          %v692 = vmul.f32 %v686, %v690
          %vm693 = vcmask 130048
          %694 = vst.msk [vmem:[%s252] sm:$0xff] %vm693, %v692
        $region48: #{head_forward.3} parent=31 // pred_fallthru
          _
        %s695 = sand.u32 %s138, 1
        %s696 = scalar_lea.sflag [#allocation6], %s695
        %s697 = sand.u32 %s138, 1
        %s698 = smul.addr %s697, 8
        %s699 = scalar_lea.vmem [#allocation5], %s698
        // Predicated region
        $region49: #{head_forward.3} parent=31 // pred_check
          %p700 = pneg %p148
        $region50: #{head_forward.3} parent=31 // pred_check_branch
          %702 = sbr.rel (%p700) target = $region52
        $region51: #{head_forward.3} parent=31 // pred_region
          %s704 = ssub.s32 128, 128
          %705 = vsyncadd %s696, %s704
          %s706 = sadd.s32 %s23, %s22
          %s707 = smul.addr %s706, 128
          %s708 = scalar_lea.hbm %s3, %s707
          %s710 = sshll.u32 %s699, 4
          %s711 = int_to_ptr.vmem [resolvable:$true] %s710
          %713 = dma.vmem_to_hbm [thread:$0]  %s711, 128, %s708, %s696
        $region52: #{head_forward.3} parent=31 // pred_fallthru
          _
      $region32: #{head_forward.3} parent=5 // pred_fallthru
        _
      %p714 = scmp.le.s32.totalorder 2, %s12
      // Predicated region
      $region53: #{head_forward.3} parent=5 // pred_check
        %p715 = pneg %p714
      $region54: #{head_forward.3} parent=5 // pred_check_branch
        %717 = sbr.rel (%p715) target = $region56
      $region55: #{head_forward.3} parent=5 // pred_region
        %s718 = ssub.s32 %s12, 2
        // Predicated region
        $region57: #{head_forward.3} parent=55 // pred_check
          %p719 = pneg %p154
        $region58: #{head_forward.3} parent=55 // pred_check_branch
          %721 = sbr.rel (%p719) target = $region60
        $region59: #{head_forward.3} parent=55 // pred_region
          %s722 = sand.u32 %s139, 1
          %s723 = scalar_lea.sflag [#allocation6], %s722
          %s724 = sand.u32 %s139, 1
          %s725 = smul.addr %s724, 8
          %s726 = scalar_lea.vmem [#allocation5], %s725
          %727 = dma.done %s723, 128
        $region60: #{head_forward.3} parent=55 // pred_fallthru
          _
      $region56: #{head_forward.3} parent=5 // pred_fallthru
        _
    $region6: #{head_forward.3} parent=1 // loop_footer
      %s16 = sadd.s32 1, %s12
    $region7: #{head_forward.3} parent=1 // loop_footer_branch
      %11 = sbr.rel target = $region3
    $region8: #{head_forward.3} parent=1 // loop_exit
      _
    %728 = vsyncpa [#allocation6], 1
    %s729 = scalar_lea.sflag [#allocation6], 1
    %730 = vsyncpa %s729, 1

</llo_original>
